<compile_context>
chip_gen: v6e
topology: v6e:2x2x1
jax: 0.10.0
libtpu: 0.0.40
codegen_flags: <defaults>
</compile_context>

<pallas_src>
import functools

import jax
import jax.numpy as jnp
import numpy as np
from jax.experimental import pallas as pl
from jax.experimental.pallas import tpu as pltpu


# ---------------------------------------------------------------------------
# Plain-JAX glue: per-batch kNN graph + EdgeConv feature gather.
# ---------------------------------------------------------------------------
def knn_graph(x, k, num_batches, n_per):
    """k nearest neighbors of every point within its own batch segment.

    Matches torch_cluster.knn(x, x, k, batch, batch) used by DynamicEdgeConv:
    the query point itself (distance 0) is among its k neighbors.
    Returns (N, k) int32 indices into the flat point set.
    """
    xb = x.reshape(num_batches, n_per, -1)
    d2 = jnp.sum((xb[:, :, None, :] - xb[:, None, :, :]) ** 2, axis=-1)  # (B,n,n)
    _, idx = jax.lax.top_k(-d2, k)                                       # (B,n,k)
    offs = (jnp.arange(num_batches, dtype=jnp.int32) * n_per)[:, None, None]
    return (idx.astype(jnp.int32) + offs).reshape(num_batches * n_per, k)


def edge_features(x, nbr_idx):
    """EdgeConv message input [x_i, x_j - x_i] per (center, neighbor) pair.

    x: (N, C), nbr_idx: (N, K)  ->  (N, K, 2C), contiguous and center-major.
    """
    xi = x[:, None, :]                                                   # (N,1,C)
    xj = x[nbr_idx]                                                      # (N,K,C)
    return jnp.concatenate([jnp.broadcast_to(xi, xj.shape), xj - xi], axis=-1)


# ---------------------------------------------------------------------------
# Pallas kernel: EdgeConv 2-layer message MLP + max aggregation over K slots.
# ---------------------------------------------------------------------------
def _edgeconv_kernel(feat_ref, w1_ref, b1_ref, w2_ref, b2_ref, out_ref, *, k):
    """feat_ref: (tm*K, D) bf16, weights bf16, biases f32, out_ref: (tm, F) f32."""
    tm, f_out = out_ref.shape
    h = jnp.dot(feat_ref[...], w1_ref[...],
                preferred_element_type=jnp.float32) + b1_ref[...]
    h = jnp.maximum(h, 0.0)                                   # ReLU (f32 on VPU)
    msg = jnp.dot(h.astype(jnp.bfloat16), w2_ref[...],
                  preferred_element_type=jnp.float32) + b2_ref[...]
    msg = jnp.maximum(msg, 0.0)                               # MLP's final ReLU
    # Max-aggregate over the K neighbor slots of each center.  (DGCNN's outer
    # ReLU is a no-op since messages are already >= 0.)
    out_ref[...] = jnp.max(msg.reshape(tm, k, f_out), axis=1)


def edgeconv_pallas(feat, w1, b1, w2, b2, *, tm):
    """feat: (M, K, D) f32 edge features -> (M, F) f32 EdgeConv output."""
    m, k, d = feat.shape
    hid = w1.shape[1]
    f_out = w2.shape[1]

    # bf16 MXU inputs (full rate on v6e/v7x, half the feat DMA bytes); f32 accum.
    feat_flat = feat.reshape(m * k, d).astype(jnp.bfloat16)   # contiguous (M*K, D)
    w1b = w1.astype(jnp.bfloat16)
    w2b = w2.astype(jnp.bfloat16)

    grid = (pl.cdiv(m, tm),)
    kernel = functools.partial(_edgeconv_kernel, k=k)
    return pl.pallas_call(
        kernel,
        out_shape=jax.ShapeDtypeStruct((m, f_out), jnp.float32),
        grid=grid,
        in_specs=[
            pl.BlockSpec((tm * k, d), lambda i: (i, 0)),       # edge features
            pl.BlockSpec((d, hid), lambda i: (0, 0)),          # resident weights
            pl.BlockSpec((1, hid), lambda i: (0, 0)),
            pl.BlockSpec((hid, f_out), lambda i: (0, 0)),
            pl.BlockSpec((1, f_out), lambda i: (0, 0)),
        ],
        out_specs=pl.BlockSpec((tm, f_out), lambda i: (i, 0)),
        compiler_params=pltpu.CompilerParams(
            dimension_semantics=("parallel",)),
    )(feat_flat, w1b, b1, w2b, b2)


# ---------------------------------------------------------------------------
# Pallas kernel: fused head MLP + sigmoid.
# ---------------------------------------------------------------------------
def _head_kernel(x_ref, w1_ref, b1_ref, w2_ref, b2_ref, w3_ref, b3_ref, out_ref):
    h = jnp.dot(x_ref[...], w1_ref[...],
                preferred_element_type=jnp.float32) + b1_ref[...]
    h = jnp.maximum(h, 0.0)                                   # Linear(576,256)+ReLU
    h = jnp.dot(h.astype(jnp.bfloat16), w2_ref[...],
                preferred_element_type=jnp.float32) + b2_ref[...]   # Linear(256,64)
    fea = jnp.dot(h.astype(jnp.bfloat16), w3_ref[...],
                  preferred_element_type=jnp.float32) + b3_ref[...]  # Linear(64,1)
    out_ref[...] = jax.nn.sigmoid(fea)


def head_pallas(x4, w1, b1, w2, b2, w3, b3, *, tm):
    n, d_in = x4.shape
    h1 = w1.shape[1]
    h2 = w2.shape[1]
    x4b = x4.astype(jnp.bfloat16)
    return pl.pallas_call(
        _head_kernel,
        out_shape=jax.ShapeDtypeStruct((n, 1), jnp.float32),
        grid=(pl.cdiv(n, tm),),
        in_specs=[
            pl.BlockSpec((tm, d_in), lambda i: (i, 0)),
            pl.BlockSpec((d_in, h1), lambda i: (0, 0)),
            pl.BlockSpec((1, h1), lambda i: (0, 0)),
            pl.BlockSpec((h1, h2), lambda i: (0, 0)),
            pl.BlockSpec((1, h2), lambda i: (0, 0)),
            pl.BlockSpec((h2, 1), lambda i: (0, 0)),
            pl.BlockSpec((1, 1), lambda i: (0, 0)),
        ],
        out_specs=pl.BlockSpec((tm, 1), lambda i: (i, 0)),
        compiler_params=pltpu.CompilerParams(
            dimension_semantics=("parallel",)),
    )(x4b, w1.astype(jnp.bfloat16), b1, w2.astype(jnp.bfloat16), b2,
      w3.astype(jnp.bfloat16), b3)


# ---------------------------------------------------------------------------
# Full NoiseScoreNet forward.
# ---------------------------------------------------------------------------
def noise_score_net_forward(x, pos, batch, params, *, k, num_batches, n_per, tm):
    """x: (N, 3) point features, pos: (N, 3), batch: (N,) contiguous batch ids
    with n_per points per cloud.  Returns (x4, score) like the torch module,
    plus the gathered edge features for reference checking."""
    del pos      # DGCNN.forward ignores pos (it calls conv(x, batch)).
    del batch    # batch ids are contiguous segments of n_per points (sorted).

    (w1a, b1a, w2a, b2a), (w1b, b1b, w2b, b2b), head_params = params

    # ---- dg1: DynamicEdgeConv(MLP([6, 32, 64]), k=16, 'max') + ReLU --------- #
    idx1 = knn_graph(x, k, num_batches, n_per)
    f1 = edge_features(x, idx1)                                # (N, K, 6)
    x1 = edgeconv_pallas(f1, w1a, b1a, w2a, b2a, tm=tm)        # (N, 64)

    # ---- dg2: DynamicEdgeConv(MLP([128, 128, 256])) on the NEW graph of x1 -- #
    idx2 = knn_graph(x1, k, num_batches, n_per)
    f2 = edge_features(x1, idx2)                               # (N, K, 128)
    x2 = edgeconv_pallas(f2, w1b, b1b, w2b, b2b, tm=tm)        # (N, 256)
    # TODO(synk): for C>=64 the x_i/x_j contributions of the first Linear could be
    # hoisted per-point (x @ W) outside the kernel to cut per-edge MXU work K-fold.

    # ---- global max pool + broadcast back to every point -------------------- #
    gf = x2.reshape(num_batches, n_per, -1).max(axis=1)        # (B, 256)
    # torch: repeat_interleave(global_fea, 1024, dim=0) — identical to repeating
    # each cloud's global feature for its n_per points (n_per == 1024 in torch).
    gf_rep = jnp.repeat(gf, n_per, axis=0)                     # (N, 256)

    x4 = jnp.concatenate([x1, x2, gf_rep], axis=-1)            # (N, 576)

    # ---- head MLP + sigmoid -------------------------------------------------- #
    score = head_pallas(x4, *head_params, tm=tm)               # (N, 1)
    return x4, score, (f1, f2)


# ---------------------------------------------------------------------------
# Plain-JAX references (f32, highest matmul precision).
# ---------------------------------------------------------------------------
def edgeconv_reference(feat, w1, b1, w2, b2):
    hp = jax.lax.Precision.HIGHEST
    h = jnp.maximum(jnp.einsum("mkd,dh->mkh", feat, w1, precision=hp) + b1, 0.0)
    msg = jnp.maximum(jnp.einsum("mkh,hf->mkf", h, w2, precision=hp) + b2, 0.0)
    return msg.max(axis=1)


def head_reference(x4, w1, b1, w2, b2, w3, b3):
    hp = jax.lax.Precision.HIGHEST
    h = jnp.maximum(jnp.dot(x4, w1, precision=hp) + b1, 0.0)
    h = jnp.dot(h, w2, precision=hp) + b2
    fea = jnp.dot(h, w3, precision=hp) + b3
    return jax.nn.sigmoid(fea)


if __name__ == "__main__":
    key = jax.random.PRNGKey(0)

    # Small deterministic problem: 2 point clouds x 32 points, 3-channel input.
    B = 2
    n_per = 32        # points per cloud (the torch module assumes 1024)
    N = B * n_per
    K = 16            # DGCNN default k
    C_IN = 3
    tm = 32           # rows per tile -> grid = (2,): keeps both v7x TCs busy.
                      # At realistic N (1024 per cloud) sweep tm in {256, 512}.

    keys = jax.random.split(key, 16)
    x = jax.random.normal(keys[0], (N, C_IN), dtype=jnp.float32)
    pos = jax.random.uniform(keys[1], (N, 3), dtype=jnp.float32)
    batch = jnp.repeat(jnp.arange(B, dtype=jnp.int32), n_per)

    def lin(kw, kb, fan_in, fan_out, ws=0.2, bs=0.1):
        w = ws * jax.random.normal(kw, (fan_in, fan_out), dtype=jnp.float32)
        b = bs * jax.random.normal(kb, (1, fan_out), dtype=jnp.float32)
        return w, b

    # dg1 nn = MLP([6, 32, 64]); dg2 nn = MLP([128, 128, 256]).
    w1a, b1a = lin(keys[2], keys[3], 2 * C_IN, 32)
    w2a, b2a = lin(keys[4], keys[5], 32, 64)
    w1b, b1b = lin(keys[6], keys[7], 2 * 64, 128)
    w2b, b2b = lin(keys[8], keys[9], 128, 256)
    # head = Linear(576,256) + ReLU + Linear(256,64) + Linear(64,1).
    hw1, hb1 = lin(keys[10], keys[11], 576, 256, ws=0.1, bs=0.05)
    hw2, hb2 = lin(keys[12], keys[13], 256, 64, ws=0.1, bs=0.05)
    hw3, hb3 = lin(keys[14], keys[15], 64, 1, ws=0.1, bs=0.05)

    params = ((w1a, b1a, w2a, b2a),
              (w1b, b1b, w2b, b2b),
              (hw1, hb1, hw2, hb2, hw3, hb3))

    x4, score, (f1, f2) = noise_score_net_forward(
        x, pos, batch, params, k=K, num_batches=B, n_per=n_per, tm=tm)
    jax.block_until_ready((x4, score))

    assert x4.shape == (N, 64 + 256 + 256)
    assert score.shape == (N, 1)

    # Per-kernel reference checks (bf16 MXU inputs -> loose tolerance).
    x1_out = x4[:, :64]
    x2_out = x4[:, 64:320]
    ref_x1 = edgeconv_reference(f1, w1a, b1a, w2a, b2a)
    ref_x2 = edgeconv_reference(f2, w1b, b1b, w2b, b2b)
    ref_score = head_reference(x4, hw1, hb1, hw2, hb2, hw3, hb3)
    np.testing.assert_allclose(np.asarray(x1_out), np.asarray(ref_x1),
                               rtol=5e-2, atol=5e-2)
    np.testing.assert_allclose(np.asarray(x2_out), np.asarray(ref_x2),
                               rtol=5e-2, atol=5e-2)
    np.testing.assert_allclose(np.asarray(score), np.asarray(ref_score),
                               rtol=5e-2, atol=5e-2)

    # TODO(synk): the dynamic kNN graph construction (per-batch pairwise
    # distances + top_k) is data-dependent sort/gather with no clean Pallas
    # equivalent; it stays in plain-JAX glue and scales O(n_per^2) per cloud.
    print("KERNEL_OK")
</pallas_src>

<mosaic_0001>
module attributes {stable_mosaic.version = 11 : i64} {
  func.func @_edgeconv_kernel(%arg0: i32, %arg1: memref<512x6xbf16, #tpu.memory_space<vmem>>, %arg2: memref<6x32xbf16, #tpu.memory_space<vmem>>, %arg3: memref<1x32xf32, #tpu.memory_space<vmem>>, %arg4: memref<32x64xbf16, #tpu.memory_space<vmem>>, %arg5: memref<1x64xf32, #tpu.memory_space<vmem>>, %arg6: memref<32x64xf32, #tpu.memory_space<vmem>>) attributes {dimension_semantics = [#tpu.dimension_semantics<parallel>], iteration_bounds = array<i64: 2>, scalar_prefetch = 0 : i64, scratch_operands = 0 : i64, tpu.core_type = #tpu.core_type<tc>, window_params = [{transform_indices = @transform_0, window_bounds = array<i64: 512, 6>}, {pipeline_mode = #tpu.pipeline_mode<synchronous>, transform_indices = @transform_1, window_bounds = array<i64: 6, 32>}, {pipeline_mode = #tpu.pipeline_mode<synchronous>, transform_indices = @transform_2, window_bounds = array<i64: 1, 32>}, {pipeline_mode = #tpu.pipeline_mode<synchronous>, transform_indices = @transform_3, window_bounds = array<i64: 32, 64>}, {pipeline_mode = #tpu.pipeline_mode<synchronous>, transform_indices = @transform_4, window_bounds = array<i64: 1, 64>}, {transform_indices = @transform_5, window_bounds = array<i64: 32, 64>}]} {
    %c0 = arith.constant 0 : index
    %c0_0 = arith.constant 0 : index
    %0 = vector.load %arg1[%c0, %c0_0] : memref<512x6xbf16, #tpu.memory_space<vmem>>, vector<512x6xbf16>
    %c0_1 = arith.constant 0 : index
    %c0_2 = arith.constant 0 : index
    %1 = vector.load %arg2[%c0_1, %c0_2] : memref<6x32xbf16, #tpu.memory_space<vmem>>, vector<6x32xbf16>
    %cst = arith.constant dense<0.000000e+00> : vector<512x32xf32>
    %2 = tpu.matmul %0, %1, %cst {dimension_numbers = #tpu.dot_dimension_numbers<[1], [0], [0], [1], [0, 0, 1, 1], [], []>} : vector<512x6xbf16>, vector<6x32xbf16>, vector<512x32xf32> -> vector<512x32xf32>
    %c0_3 = arith.constant 0 : index
    %c0_4 = arith.constant 0 : index
    %3 = vector.load %arg3[%c0_3, %c0_4] : memref<1x32xf32, #tpu.memory_space<vmem>>, vector<1x32xf32>
    %4 = vector.broadcast %3 : vector<1x32xf32> to vector<512x32xf32>
    %5 = arith.addf %2, %4 : vector<512x32xf32>
    %cst_5 = arith.constant 0.000000e+00 : f32
    %6 = vector.broadcast %cst_5 : f32 to vector<512x32xf32>
    %7 = arith.maximumf %5, %6 : vector<512x32xf32>
    %8 = arith.truncf %7 : vector<512x32xf32> to vector<512x32xbf16>
    %c0_6 = arith.constant 0 : index
    %c0_7 = arith.constant 0 : index
    %9 = vector.load %arg4[%c0_6, %c0_7] : memref<32x64xbf16, #tpu.memory_space<vmem>>, vector<32x64xbf16>
    %cst_8 = arith.constant dense<0.000000e+00> : vector<512x64xf32>
    %10 = tpu.matmul %8, %9, %cst_8 {dimension_numbers = #tpu.dot_dimension_numbers<[1], [0], [0], [1], [0, 0, 1, 1], [], []>} : vector<512x32xbf16>, vector<32x64xbf16>, vector<512x64xf32> -> vector<512x64xf32>
    %c0_9 = arith.constant 0 : index
    %c0_10 = arith.constant 0 : index
    %11 = vector.load %arg5[%c0_9, %c0_10] : memref<1x64xf32, #tpu.memory_space<vmem>>, vector<1x64xf32>
    %12 = vector.broadcast %11 : vector<1x64xf32> to vector<512x64xf32>
    %13 = arith.addf %10, %12 : vector<512x64xf32>
    %cst_11 = arith.constant 0.000000e+00 : f32
    %14 = vector.broadcast %cst_11 : f32 to vector<512x64xf32>
    %15 = arith.maximumf %13, %14 : vector<512x64xf32>
    %16 = vector.shape_cast %15 : vector<512x64xf32> to vector<32x16x64xf32>
    %cst_12 = arith.constant dense<0xFF800000> : vector<32x64xf32>
    %17 = vector.multi_reduction <maximumf>, %16, %cst_12 [1] : vector<32x16x64xf32> to vector<32x64xf32>
    %c0_13 = arith.constant 0 : index
    %c0_14 = arith.constant 0 : index
    %18 = vector.load %arg6[%c0_13, %c0_14] : memref<32x64xf32, #tpu.memory_space<vmem>>, vector<32x64xf32>
    tpu.vector_store %arg6[%c0_13, %c0_14], %17 {strides = array<i32>} : memref<32x64xf32, #tpu.memory_space<vmem>>, vector<32x64xf32>,
    return
  }
  func.func @transform_0(%arg0: i32) -> (i32, i32) {
    %c0_i32 = arith.constant 0 : i32
    %c0_i32_0 = arith.constant 0 : i32
    return %arg0, %c0_i32 : i32, i32
  }
  func.func @transform_1(%arg0: i32) -> (i32, i32) {
    %c0_i32 = arith.constant 0 : i32
    %c0_i32_0 = arith.constant 0 : i32
    %c0_i32_1 = arith.constant 0 : i32
    return %c0_i32, %c0_i32_0 : i32, i32
  }
  func.func @transform_2(%arg0: i32) -> (i32, i32) {
    %c0_i32 = arith.constant 0 : i32
    %c0_i32_0 = arith.constant 0 : i32
    %c0_i32_1 = arith.constant 0 : i32
    return %c0_i32, %c0_i32_0 : i32, i32
  }
  func.func @transform_3(%arg0: i32) -> (i32, i32) {
    %c0_i32 = arith.constant 0 : i32
    %c0_i32_0 = arith.constant 0 : i32
    %c0_i32_1 = arith.constant 0 : i32
    return %c0_i32, %c0_i32_0 : i32, i32
  }
  func.func @transform_4(%arg0: i32) -> (i32, i32) {
    %c0_i32 = arith.constant 0 : i32
    %c0_i32_0 = arith.constant 0 : i32
    %c0_i32_1 = arith.constant 0 : i32
    return %c0_i32, %c0_i32_0 : i32, i32
  }
  func.func @transform_5(%arg0: i32) -> (i32, i32) {
    %c0_i32 = arith.constant 0 : i32
    %c0_i32_0 = arith.constant 0 : i32
    return %arg0, %c0_i32 : i32, i32
  }
}

</mosaic_0001>

<llo_original>
// kernel: tpu_custom_call.1
$region0: #{tpu_custom_call.1}
  #allocation0 [shape = 'u32[]', space=smem, size = 0x4, offset = 0x4, fixed_abs, tag = 'smem constant byte address 0x4 - core index']
  #allocation1 [shape = 'u32[144,128]{1,0:T(1,128)}', space=vmem, size = 0x12000, scoped, tag = 'internal scratch']
  %s0 = inlined_call_operand.vmem [shape: bf16[1024,6], index: 0, kind: input, shape index: {}]
  %s1 = inlined_call_operand.vmem [shape: bf16[6,32], index: 1, kind: input, shape index: {}]
  %s2 = inlined_call_operand.vmem [shape: f32[1,32], index: 2, kind: input, shape index: {}]
  %s3 = inlined_call_operand.vmem [shape: bf16[32,64], index: 3, kind: input, shape index: {}]
  %s4 = inlined_call_operand.vmem [shape: f32[1,64], index: 4, kind: input, shape index: {}]
  %s5 = inlined_call_operand.hbm [shape: f32[64,64], index: 5, kind: output, shape index: {}]
  %s6 = sld [smem:[#allocation0]]
  $region53: #{tpu_custom_call.1} parent=0
    _
  %s8 = ssub.s32 1, %s6
  %s9 = scalar_select 0, %s8, %s6
  $region1: #{tpu_custom_call.1} parent=0
    #allocation2 [shape = 'u8[32768]{0}', space=vmem, size = 0x8000, scoped, tag = 'output window, operand 0']
    #allocation3 [shape = 's32[2]{0}', space=sflag, size = 0x8, scoped, tag = 'scoped memory for tpu_custom_call.1']
    %10 = vsyncpa [#allocation3], 0
    %s11 = scalar_lea.sflag [#allocation3], 1
    %12 = vsyncpa %s11, 0
    loop: start=0, step=1, limit=4
    $region2: #{tpu_custom_call.1} parent=1 // loop_pre_header
      _
    $region3: #{tpu_custom_call.1} parent=1 // loop_header
      %s14 = sphi 0, %s18
      %p15 = scmp.ge.s32.totalorder %s14, 4
      %s24 = sphi 0, %s26
      %s27 = sphi 0, %s24
      %s28 = sphi 0, %s27
      %s44 = sphi 0, %s28
      %s48 = sphi 0, %s48
      %s50 = sphi 0, %s48
      %s51 = sphi 0, %s50
      %s65 = sphi 0, %s51
      %s69 = sphi 0, %s69
      %s71 = sphi 0, %s69
      %s72 = sphi 0, %s71
      %s86 = sphi 0, %s72
      %s90 = sphi 0, %s90
      %s92 = sphi 0, %s90
      %s93 = sphi 0, %s92
      %s107 = sphi 0, %s93
      %s111 = sphi 0, %s111
      %s113 = sphi 0, %s111
      %s114 = sphi 0, %s113
      %s128 = sphi 0, %s114
      %s134 = sphi 0, %s136
      %s137 = sphi 0, %s134
      %s138 = sphi 0, %s137
      %s154 = sphi 0, %s138
    $region4: #{tpu_custom_call.1} parent=1 // loop_header_branch
      %17 = sbr.rel (%p15) target = $region8
    $region5: #{tpu_custom_call.1} parent=1 // loop_body
      %s19 = ssub.s32 %s14, 1
      %s20 = ssub.s32 %s14, 2
      %s21 = sadd.s32 %s14, 1
      %s22 = ssub.s32 %s14, %s21
      %p23 = scmp.eq.s32.totalorder %s22, 0
      %s25 = sadd.s32 %s24, 1
      %s26 = scalar_select %p23, %s24, %s25
      %p29 = pneg %p23
      %p30 = scmp.eq.s32.totalorder %s14, 1
      %p31 = por %p29, %p30
      %p32 = scmp.ne.s32.totalorder %s24, %s27
      %p33 = scmp.eq.s32.totalorder %s14, 0
      %p34 = por %p32, %p33
      %p35 = scmp.ne.s32.totalorder %s24, %s27
      %p36 = scmp.eq.s32.totalorder %s19, 1
      %p37 = por %p35, %p36
      %p38 = scmp.ne.s32.totalorder %s27, %s28
      %p39 = scmp.eq.s32.totalorder %s19, 0
      %p40 = por %p38, %p39
      %p41 = scmp.ne.s32.totalorder %s27, %s28
      %p42 = scmp.eq.s32.totalorder %s20, 1
      %p43 = por %p41, %p42
      %p45 = scmp.ne.s32.totalorder %s28, %s44
      %p46 = scmp.eq.s32.totalorder %s20, 0
      %p47 = por %p45, %p46
      %s49 = sadd.s32 %s48, 1
      %p52 = scmp.eq.s32.totalorder %s14, 1
      %p53 = scmp.ne.s32.totalorder %s48, %s50
      %p54 = scmp.eq.s32.totalorder %s14, 0
      %p55 = por %p53, %p54
      %p56 = scmp.ne.s32.totalorder %s48, %s50
      %p57 = scmp.eq.s32.totalorder %s19, 1
      %p58 = por %p56, %p57
      %p59 = scmp.ne.s32.totalorder %s50, %s51
      %p60 = scmp.eq.s32.totalorder %s19, 0
      %p61 = por %p59, %p60
      %p62 = scmp.ne.s32.totalorder %s50, %s51
      %p63 = scmp.eq.s32.totalorder %s20, 1
      %p64 = por %p62, %p63
      %p66 = scmp.ne.s32.totalorder %s51, %s65
      %p67 = scmp.eq.s32.totalorder %s20, 0
      %p68 = por %p66, %p67
      %s70 = sadd.s32 %s69, 1
      %p73 = scmp.eq.s32.totalorder %s14, 1
      %p74 = scmp.ne.s32.totalorder %s69, %s71
      %p75 = scmp.eq.s32.totalorder %s14, 0
      %p76 = por %p74, %p75
      %p77 = scmp.ne.s32.totalorder %s69, %s71
      %p78 = scmp.eq.s32.totalorder %s19, 1
      %p79 = por %p77, %p78
      %p80 = scmp.ne.s32.totalorder %s71, %s72
      %p81 = scmp.eq.s32.totalorder %s19, 0
      %p82 = por %p80, %p81
      %p83 = scmp.ne.s32.totalorder %s71, %s72
      %p84 = scmp.eq.s32.totalorder %s20, 1
      %p85 = por %p83, %p84
      %p87 = scmp.ne.s32.totalorder %s72, %s86
      %p88 = scmp.eq.s32.totalorder %s20, 0
      %p89 = por %p87, %p88
      %s91 = sadd.s32 %s90, 1
      %p94 = scmp.eq.s32.totalorder %s14, 1
      %p95 = scmp.ne.s32.totalorder %s90, %s92
      %p96 = scmp.eq.s32.totalorder %s14, 0
      %p97 = por %p95, %p96
      %p98 = scmp.ne.s32.totalorder %s90, %s92
      %p99 = scmp.eq.s32.totalorder %s19, 1
      %p100 = por %p98, %p99
      %p101 = scmp.ne.s32.totalorder %s92, %s93
      %p102 = scmp.eq.s32.totalorder %s19, 0
      %p103 = por %p101, %p102
      %p104 = scmp.ne.s32.totalorder %s92, %s93
      %p105 = scmp.eq.s32.totalorder %s20, 1
      %p106 = por %p104, %p105
      %p108 = scmp.ne.s32.totalorder %s93, %s107
      %p109 = scmp.eq.s32.totalorder %s20, 0
      %p110 = por %p108, %p109
      %s112 = sadd.s32 %s111, 1
      %p115 = scmp.eq.s32.totalorder %s14, 1
      %p116 = scmp.ne.s32.totalorder %s111, %s113
      %p117 = scmp.eq.s32.totalorder %s14, 0
      %p118 = por %p116, %p117
      %p119 = scmp.ne.s32.totalorder %s111, %s113
      %p120 = scmp.eq.s32.totalorder %s19, 1
      %p121 = por %p119, %p120
      %p122 = scmp.ne.s32.totalorder %s113, %s114
      %p123 = scmp.eq.s32.totalorder %s19, 0
      %p124 = por %p122, %p123
      %p125 = scmp.ne.s32.totalorder %s113, %s114
      %p126 = scmp.eq.s32.totalorder %s20, 1
      %p127 = por %p125, %p126
      %p129 = scmp.ne.s32.totalorder %s114, %s128
      %p130 = scmp.eq.s32.totalorder %s20, 0
      %p131 = por %p129, %p130
      %s132 = ssub.s32 %s14, %s21
      %p133 = scmp.eq.s32.totalorder %s132, 0
      %s135 = sadd.s32 %s134, 1
      %s136 = scalar_select %p133, %s134, %s135
      %p139 = pneg %p133
      %p140 = scmp.eq.s32.totalorder %s14, 1
      %p141 = por %p139, %p140
      %p142 = scmp.ne.s32.totalorder %s134, %s137
      %p143 = scmp.eq.s32.totalorder %s14, 0
      %p144 = por %p142, %p143
      %p145 = scmp.ne.s32.totalorder %s134, %s137
      %p146 = scmp.eq.s32.totalorder %s19, 1
      %p147 = por %p145, %p146
      %p148 = scmp.ne.s32.totalorder %s137, %s138
      %p149 = scmp.eq.s32.totalorder %s19, 0
      %p150 = por %p148, %p149
      %p151 = scmp.ne.s32.totalorder %s137, %s138
      %p152 = scmp.eq.s32.totalorder %s20, 1
      %p153 = por %p151, %p152
      %p155 = scmp.ne.s32.totalorder %s138, %s154
      %p156 = scmp.eq.s32.totalorder %s20, 0
      %p157 = por %p155, %p156
      %p158 = scmp.le.s32.totalorder 1, %s14
      %p159 = scmp.lt.s32.totalorder %s14, 3
      %p160 = pnand %p158, %p159
      %p161 = pneg %p160
      // Predicated region
      $region9: #{tpu_custom_call.1} parent=5 // pred_check
        _
      $region10: #{tpu_custom_call.1} parent=5 // pred_check_branch
        %163 = sbr.rel (%p160) target = $region12
      $region11: #{tpu_custom_call.1} parent=5 // pred_region
        %s164 = ssub.s32 %s14, 1
        // Predicated region
        $region13: #{tpu_custom_call.1} parent=11 // pred_check
          %p165 = pneg %p61
        $region14: #{tpu_custom_call.1} parent=11 // pred_check_branch
          %167 = sbr.rel (%p165) target = $region16
        $region15: #{tpu_custom_call.1} parent=11 // pred_region
          _
        $region16: #{tpu_custom_call.1} parent=11 // pred_fallthru
          _
        // Predicated region
        $region17: #{tpu_custom_call.1} parent=11 // pred_check
          %p168 = pneg %p82
        $region18: #{tpu_custom_call.1} parent=11 // pred_check_branch
          %170 = sbr.rel (%p168) target = $region20
        $region19: #{tpu_custom_call.1} parent=11 // pred_region
          _
        $region20: #{tpu_custom_call.1} parent=11 // pred_fallthru
          _
        // Predicated region
        $region21: #{tpu_custom_call.1} parent=11 // pred_check
          %p171 = pneg %p103
        $region22: #{tpu_custom_call.1} parent=11 // pred_check_branch
          %173 = sbr.rel (%p171) target = $region24
        $region23: #{tpu_custom_call.1} parent=11 // pred_region
          _
        $region24: #{tpu_custom_call.1} parent=11 // pred_fallthru
          _
        // Predicated region
        $region25: #{tpu_custom_call.1} parent=11 // pred_check
          %p174 = pneg %p124
        $region26: #{tpu_custom_call.1} parent=11 // pred_check_branch
          %176 = sbr.rel (%p174) target = $region28
        $region27: #{tpu_custom_call.1} parent=11 // pred_region
          _
        $region28: #{tpu_custom_call.1} parent=11 // pred_fallthru
          _
      $region12: #{tpu_custom_call.1} parent=5 // pred_fallthru
        _
      %p177 = scmp.lt.s32.totalorder %s14, 2
      // Predicated region
      $region29: #{tpu_custom_call.1} parent=5 // pred_check
        %p178 = pneg %p177
      $region30: #{tpu_custom_call.1} parent=5 // pred_check_branch
        %180 = sbr.rel (%p178) target = $region32
      $region31: #{tpu_custom_call.1} parent=5 // pred_region
        // Predicated region
        $region33: #{tpu_custom_call.1} parent=31 // pred_check
          %p181 = pneg %p34
        $region34: #{tpu_custom_call.1} parent=31 // pred_check_branch
          %183 = sbr.rel (%p181) target = $region36
        $region35: #{tpu_custom_call.1} parent=31 // pred_region
          %s184 = smul.u32 64, %s14
          %p185 = scmp.lt.s32.totalorder %s184, 127
          %s186 = scalar_select %p185, %s184, 127
          %s187 = smul.addr %s186, 4
          %s188 = scalar_lea.vmem %s0, %s187
          %s189 = smul.u32 64, %s14
        $region36: #{tpu_custom_call.1} parent=31 // pred_fallthru
          _
      $region32: #{tpu_custom_call.1} parent=5 // pred_fallthru
        _
      %p190 = scmp.le.s32.totalorder 1, %s14
      %p191 = scmp.lt.s32.totalorder %s14, 3
      %p192 = pnand %p190, %p191
      %p193 = pneg %p192
      // Predicated region
      $region37: #{tpu_custom_call.1} parent=5 // pred_check
        _
      $region38: #{tpu_custom_call.1} parent=5 // pred_check_branch
        %195 = sbr.rel (%p192) target = $region40
      $region39: #{tpu_custom_call.1} parent=5 // pred_region
        %s196 = ssub.s32 %s14, 1
        %s197 = smul.u32 64, %s19
        %p198 = scmp.lt.s32.totalorder %s197, 127
        %s199 = scalar_select %p198, %s197, 127
        %s200 = smul.addr %s199, 4
        %s201 = scalar_lea.vmem %s0, %s200
        %p202 = pneg %p40
        %p203 = pneg %p37
        %p204 = pneg %p61
        %p205 = pneg %p58
        %p206 = pneg %p82
        %p207 = pneg %p79
        %p208 = pneg %p103
        %p209 = pneg %p100
        %p210 = pneg %p124
        %p211 = pneg %p121
        %p212 = pneg %p150
        %p213 = pneg %p147
        %s214 = sand.u32 %s137, 1
        %s215 = scalar_lea.sflag [#allocation3], %s214
        %s216 = sand.u32 %s137, 1
        %s217 = smul.addr %s216, 32
        %s218 = scalar_lea.vmem [#allocation2], %s217
        %s219 = smul.u32 64, %s19
        %p220 = scmp.lt.s32.totalorder %s219, 127
        %s221 = scalar_select %p220, %s219, 127
        %s222 = smul.addr %s221, 4
        %s223 = scalar_lea.vmem %s0, %s222
        %s224 = smul.u32 64, %s19
        %s225 = smul.u32 4, %s19
        %v227 = vld [vmem:[%s223] sm:$0xf]
        %v228 = vld [vmem:[%s223 + $0x4] sm:$0xf]
        %v229 = vld [vmem:[%s223 + $0x8] sm:$0xf]
        %v230 = vld [vmem:[%s223 + $0xc] sm:$0xf]
        %v231 = vld [vmem:[%s223 + $0x10] sm:$0xf]
        %v232 = vld [vmem:[%s223 + $0x14] sm:$0xf]
        %v233 = vld [vmem:[%s223 + $0x18] sm:$0xf]
        %v234 = vld [vmem:[%s223 + $0x1c] sm:$0xf]
        %v235 = vld [vmem:[%s223 + $0x20] sm:$0xf]
        %v236 = vld [vmem:[%s223 + $0x24] sm:$0xf]
        %v237 = vld [vmem:[%s223 + $0x28] sm:$0xf]
        %v238 = vld [vmem:[%s223 + $0x2c] sm:$0xf]
        %v239 = vld [vmem:[%s223 + $0x30] sm:$0xf]
        %v240 = vld [vmem:[%s223 + $0x34] sm:$0xf]
        %v241 = vld [vmem:[%s223 + $0x38] sm:$0xf]
        %v242 = vld [vmem:[%s223 + $0x3c] sm:$0xf]
        %v243 = vld [vmem:[%s223 + $0x40] sm:$0xf]
        %v244 = vld [vmem:[%s223 + $0x44] sm:$0xf]
        %v245 = vld [vmem:[%s223 + $0x48] sm:$0xf]
        %v246 = vld [vmem:[%s223 + $0x4c] sm:$0xf]
        %v247 = vld [vmem:[%s223 + $0x50] sm:$0xf]
        %v248 = vld [vmem:[%s223 + $0x54] sm:$0xf]
        %v249 = vld [vmem:[%s223 + $0x58] sm:$0xf]
        %v250 = vld [vmem:[%s223 + $0x5c] sm:$0xf]
        %v251 = vld [vmem:[%s223 + $0x60] sm:$0xf]
        %v252 = vld [vmem:[%s223 + $0x64] sm:$0xf]
        %v253 = vld [vmem:[%s223 + $0x68] sm:$0xf]
        %v254 = vld [vmem:[%s223 + $0x6c] sm:$0xf]
        %v255 = vld [vmem:[%s223 + $0x70] sm:$0xf]
        %v256 = vld [vmem:[%s223 + $0x74] sm:$0xf]
        %v257 = vld [vmem:[%s223 + $0x78] sm:$0xf]
        %v258 = vld [vmem:[%s223 + $0x7c] sm:$0xf]
        %v259 = vld [vmem:[%s223 + $0x80] sm:$0xf]
        %v260 = vld [vmem:[%s223 + $0x84] sm:$0xf]
        %v261 = vld [vmem:[%s223 + $0x88] sm:$0xf]
        %v262 = vld [vmem:[%s223 + $0x8c] sm:$0xf]
        %v263 = vld [vmem:[%s223 + $0x90] sm:$0xf]
        %v264 = vld [vmem:[%s223 + $0x94] sm:$0xf]
        %v265 = vld [vmem:[%s223 + $0x98] sm:$0xf]
        %v266 = vld [vmem:[%s223 + $0x9c] sm:$0xf]
        %v267 = vld [vmem:[%s223 + $0xa0] sm:$0xf]
        %v268 = vld [vmem:[%s223 + $0xa4] sm:$0xf]
        %v269 = vld [vmem:[%s223 + $0xa8] sm:$0xf]
        %v270 = vld [vmem:[%s223 + $0xac] sm:$0xf]
        %v271 = vld [vmem:[%s223 + $0xb0] sm:$0xf]
        %v272 = vld [vmem:[%s223 + $0xb4] sm:$0xf]
        %v273 = vld [vmem:[%s223 + $0xb8] sm:$0xf]
        %v274 = vld [vmem:[%s223 + $0xbc] sm:$0xf]
        %v275 = vld [vmem:[%s223 + $0xc0] sm:$0xf]
        %v276 = vld [vmem:[%s223 + $0xc4] sm:$0xf]
        %v277 = vld [vmem:[%s223 + $0xc8] sm:$0xf]
        %v278 = vld [vmem:[%s223 + $0xcc] sm:$0xf]
        %v279 = vld [vmem:[%s223 + $0xd0] sm:$0xf]
        %v280 = vld [vmem:[%s223 + $0xd4] sm:$0xf]
        %v281 = vld [vmem:[%s223 + $0xd8] sm:$0xf]
        %v282 = vld [vmem:[%s223 + $0xdc] sm:$0xf]
        %v283 = vld [vmem:[%s223 + $0xe0] sm:$0xf]
        %v284 = vld [vmem:[%s223 + $0xe4] sm:$0xf]
        %v285 = vld [vmem:[%s223 + $0xe8] sm:$0xf]
        %v286 = vld [vmem:[%s223 + $0xec] sm:$0xf]
        %v287 = vld [vmem:[%s223 + $0xf0] sm:$0xf]
        %v288 = vld [vmem:[%s223 + $0xf4] sm:$0xf]
        %v289 = vld [vmem:[%s223 + $0xf8] sm:$0xf]
        %v290 = vld [vmem:[%s223 + $0xfc] sm:$0xf]
        %v291 = vld [vmem:[%s1] sm:$0x7]
        %v292 = vld [vmem:[%s2] sm:$0x1]
        %v294 = vlaneseq
        %v295 = vshrl.u32 %v294, 7
        %v296 = vsub.s32 0, %v295
        %v297 = vrot.slane %v292, %v296
        %v363 = vunpack.c.l.b16 %v227
        %v364 = vunpack.c.l.b16 %v228
        %v365 = vunpack.c.l.b16 %v229
        %v366 = vunpack.c.l.b16 %v230
        %v367 = vunpack.c.l.b16 %v231
        %v368 = vunpack.c.l.b16 %v232
        %v369 = vunpack.c.l.b16 %v233
        %v370 = vunpack.c.l.b16 %v234
        %v371 = vunpack.c.l.b16 %v235
        %v372 = vunpack.c.l.b16 %v236
        %v373 = vunpack.c.l.b16 %v237
        %v374 = vunpack.c.l.b16 %v238
        %v375 = vunpack.c.l.b16 %v239
        %v376 = vunpack.c.l.b16 %v240
        %v377 = vunpack.c.l.b16 %v241
        %v378 = vunpack.c.l.b16 %v242
        %v379 = vunpack.c.l.b16 %v243
        %v380 = vunpack.c.l.b16 %v244
        %v381 = vunpack.c.l.b16 %v245
        %v382 = vunpack.c.l.b16 %v246
        %v383 = vunpack.c.l.b16 %v247
        %v384 = vunpack.c.l.b16 %v248
        %v385 = vunpack.c.l.b16 %v249
        %v386 = vunpack.c.l.b16 %v250
        %v387 = vunpack.c.l.b16 %v251
        %v388 = vunpack.c.l.b16 %v252
        %v389 = vunpack.c.l.b16 %v253
        %v390 = vunpack.c.l.b16 %v254
        %v391 = vunpack.c.l.b16 %v255
        %v392 = vunpack.c.l.b16 %v256
        %v393 = vunpack.c.l.b16 %v257
        %v394 = vunpack.c.l.b16 %v258
        %v395 = vunpack.c.l.b16 %v259
        %v396 = vunpack.c.l.b16 %v260
        %v397 = vunpack.c.l.b16 %v261
        %v398 = vunpack.c.l.b16 %v262
        %v399 = vunpack.c.l.b16 %v263
        %v400 = vunpack.c.l.b16 %v264
        %v401 = vunpack.c.l.b16 %v265
        %v402 = vunpack.c.l.b16 %v266
        %v403 = vunpack.c.l.b16 %v267
        %v404 = vunpack.c.l.b16 %v268
        %v405 = vunpack.c.l.b16 %v269
        %v406 = vunpack.c.l.b16 %v270
        %v407 = vunpack.c.l.b16 %v271
        %v408 = vunpack.c.l.b16 %v272
        %v409 = vunpack.c.l.b16 %v273
        %v410 = vunpack.c.l.b16 %v274
        %v411 = vunpack.c.l.b16 %v275
        %v412 = vunpack.c.l.b16 %v276
        %v413 = vunpack.c.l.b16 %v277
        %v414 = vunpack.c.l.b16 %v278
        %v415 = vunpack.c.l.b16 %v279
        %v416 = vunpack.c.l.b16 %v280
        %v417 = vunpack.c.l.b16 %v281
        %v418 = vunpack.c.l.b16 %v282
        %v419 = vunpack.c.l.b16 %v283
        %v420 = vunpack.c.l.b16 %v284
        %v421 = vunpack.c.l.b16 %v285
        %v422 = vunpack.c.l.b16 %v286
        %v423 = vunpack.c.l.b16 %v287
        %v424 = vunpack.c.l.b16 %v288
        %v425 = vunpack.c.l.b16 %v289
        %v426 = vunpack.c.l.b16 %v290
        %v427 = vpack.c.b16 %v364, %v363
        %v428 = vpack.c.b16 %v366, %v365
        %v429 = vpack.c.b16 %v368, %v367
        %v430 = vpack.c.b16 %v370, %v369
        %v431 = vpack.c.b16 %v372, %v371
        %v432 = vpack.c.b16 %v374, %v373
        %v433 = vpack.c.b16 %v376, %v375
        %v434 = vpack.c.b16 %v378, %v377
        %v435 = vpack.c.b16 %v380, %v379
        %v436 = vpack.c.b16 %v382, %v381
        %v437 = vpack.c.b16 %v384, %v383
        %v438 = vpack.c.b16 %v386, %v385
        %v439 = vpack.c.b16 %v388, %v387
        %v440 = vpack.c.b16 %v390, %v389
        %v441 = vpack.c.b16 %v392, %v391
        %v442 = vpack.c.b16 %v394, %v393
        %v443 = vpack.c.b16 %v396, %v395
        %v444 = vpack.c.b16 %v398, %v397
        %v445 = vpack.c.b16 %v400, %v399
        %v446 = vpack.c.b16 %v402, %v401
        %v447 = vpack.c.b16 %v404, %v403
        %v448 = vpack.c.b16 %v406, %v405
        %v449 = vpack.c.b16 %v408, %v407
        %v450 = vpack.c.b16 %v410, %v409
        %v451 = vpack.c.b16 %v412, %v411
        %v452 = vpack.c.b16 %v414, %v413
        %v453 = vpack.c.b16 %v416, %v415
        %v454 = vpack.c.b16 %v418, %v417
        %v455 = vpack.c.b16 %v420, %v419
        %v456 = vpack.c.b16 %v422, %v421
        %v457 = vpack.c.b16 %v424, %v423
        %v458 = vpack.c.b16 %v426, %v425
        %vm459 = vcmask 48128
        %v461 = vsel %vm459, %v427, 0
        %v464 = vsel %vm459, %v428, 0
        %v467 = vsel %vm459, %v429, 0
        %v470 = vsel %vm459, %v430, 0
        %v473 = vsel %vm459, %v431, 0
        %v476 = vsel %vm459, %v432, 0
        %v479 = vsel %vm459, %v433, 0
        %v482 = vsel %vm459, %v434, 0
        %v485 = vsel %vm459, %v435, 0
        %v488 = vsel %vm459, %v436, 0
        %v491 = vsel %vm459, %v437, 0
        %v494 = vsel %vm459, %v438, 0
        %v497 = vsel %vm459, %v439, 0
        %v500 = vsel %vm459, %v440, 0
        %v503 = vsel %vm459, %v441, 0
        %v506 = vsel %vm459, %v442, 0
        %v509 = vsel %vm459, %v443, 0
        %v512 = vsel %vm459, %v444, 0
        %v515 = vsel %vm459, %v445, 0
        %v518 = vsel %vm459, %v446, 0
        %v521 = vsel %vm459, %v447, 0
        %v524 = vsel %vm459, %v448, 0
        %v527 = vsel %vm459, %v449, 0
        %v530 = vsel %vm459, %v450, 0
        %v533 = vsel %vm459, %v451, 0
        %v536 = vsel %vm459, %v452, 0
        %v539 = vsel %vm459, %v453, 0
        %v542 = vsel %vm459, %v454, 0
        %v545 = vsel %vm459, %v455, 0
        %v548 = vsel %vm459, %v456, 0
        %v551 = vsel %vm459, %v457, 0
        %v554 = vsel %vm459, %v458, 0
        %vm556 = vcmask 1042432
        %v558 = vsel %vm556, %v291, 0
        %560 = vmatprep.subr.bf16.mxu0 0
        %561 = vmatpush1.bf16.msra.mxu0 0
        %562 = vmatprep.subr.bf16.mxu0 0
        %563 = vmatpush1.bf16.msra.mxu0 0
        %564 = vmatprep.subr.bf16.mxu0 0
        %565 = vmatpush1.bf16.msra.mxu0 0
        %566 = vmatprep.subr.bf16.mxu0 0
        %567 = vmatpush1.bf16.msra.mxu0 0
        %568 = vmatprep.subr.bf16.mxu0 0
        %569 = vmatpush1.bf16.msra.mxu0 0
        %570 = vmatprep.subr.bf16.mxu0 0
        %571 = vmatpush1.bf16.msra.mxu0 0
        %572 = vmatprep.subr.bf16.mxu0 0
        %573 = vmatpush1.bf16.msra.mxu0 0
        %574 = vmatprep.subr.bf16.mxu0 0
        %575 = vmatpush1.bf16.msra.mxu0 %v558
        %576 = vmatprep.subr.bf16.mxu0 0
        %577 = vmatpush2.bf16.msra.mxu0 0
        %578 = vmatprep.subr.bf16.mxu0 0
        %579 = vmatpush2.bf16.msra.mxu0 0
        %580 = vmatprep.subr.bf16.mxu0 0
        %581 = vmatpush2.bf16.msra.mxu0 0
        %582 = vmatprep.subr.bf16.mxu0 0
        %583 = vmatpush2.bf16.msra.mxu0 0
        %584 = vmatprep.subr.bf16.mxu0 0
        %585 = vmatpush2.bf16.msra.mxu0 0
        %586 = vmatprep.subr.bf16.mxu0 0
        %587 = vmatpush2.bf16.msra.mxu0 0
        %588 = vmatprep.subr.bf16.mxu0 0
        %589 = vmatpush2.bf16.msra.mxu0 0
        %590 = vmatprep.subr.bf16.mxu0 0
        %591 = vmatpush2.bf16.msra.mxu0 0
        %592 = vmatprep.mubr.bf16.mxu0 0
        %593 = vmatmul.mubr.bf16.gmra.mxu0 %v461
        %v594 = vpop.f32.mrf.mxu0
        %v595 = vadd.f32 %v297, %v594
        %v596 = vpop.f32.mrf.mxu0
        %v597 = vpop.f32.mrf.mxu0
        %v598 = vadd.f32 %v297, %v597
        %v599 = vpop.f32.mrf.mxu0
        %600 = vmatprep.mubr.bf16.mxu0 0
        %601 = vmatmul.mubr.bf16.gmra.mxu0 %v464
        %v602 = vpop.f32.mrf.mxu0
        %v603 = vadd.f32 %v297, %v602
        %v604 = vpop.f32.mrf.mxu0
        %v605 = vpop.f32.mrf.mxu0
        %v606 = vadd.f32 %v297, %v605
        %v607 = vpop.f32.mrf.mxu0
        %608 = vmatprep.mubr.bf16.mxu0 0
        %609 = vmatmul.mubr.bf16.gmra.mxu0 %v467
        %v610 = vpop.f32.mrf.mxu0
        %v611 = vadd.f32 %v297, %v610
        %v612 = vpop.f32.mrf.mxu0
        %v613 = vpop.f32.mrf.mxu0
        %v614 = vadd.f32 %v297, %v613
        %v615 = vpop.f32.mrf.mxu0
        %616 = vmatprep.mubr.bf16.mxu0 0
        %617 = vmatmul.mubr.bf16.gmra.mxu0 %v470
        %v618 = vpop.f32.mrf.mxu0
        %v619 = vadd.f32 %v297, %v618
        %v620 = vpop.f32.mrf.mxu0
        %v621 = vpop.f32.mrf.mxu0
        %v622 = vadd.f32 %v297, %v621
        %v623 = vpop.f32.mrf.mxu0
        %624 = vmatprep.mubr.bf16.mxu0 0
        %625 = vmatmul.mubr.bf16.gmra.mxu0 %v473
        %v626 = vpop.f32.mrf.mxu0
        %v627 = vadd.f32 %v297, %v626
        %v628 = vpop.f32.mrf.mxu0
        %v629 = vpop.f32.mrf.mxu0
        %v630 = vadd.f32 %v297, %v629
        %v631 = vpop.f32.mrf.mxu0
        %632 = vmatprep.mubr.bf16.mxu0 0
        %633 = vmatmul.mubr.bf16.gmra.mxu0 %v476
        %v634 = vpop.f32.mrf.mxu0
        %v635 = vadd.f32 %v297, %v634
        %v636 = vpop.f32.mrf.mxu0
        %v637 = vpop.f32.mrf.mxu0
        %v638 = vadd.f32 %v297, %v637
        %v639 = vpop.f32.mrf.mxu0
        %640 = vmatprep.mubr.bf16.mxu0 0
        %641 = vmatmul.mubr.bf16.gmra.mxu0 %v479
        %v642 = vpop.f32.mrf.mxu0
        %v643 = vadd.f32 %v297, %v642
        %v644 = vpop.f32.mrf.mxu0
        %v645 = vpop.f32.mrf.mxu0
        %v646 = vadd.f32 %v297, %v645
        %v647 = vpop.f32.mrf.mxu0
        %648 = vmatprep.mubr.bf16.mxu0 0
        %649 = vmatmul.mubr.bf16.gmra.mxu0 %v482
        %v650 = vpop.f32.mrf.mxu0
        %v651 = vadd.f32 %v297, %v650
        %v652 = vpop.f32.mrf.mxu0
        %v653 = vpop.f32.mrf.mxu0
        %v654 = vadd.f32 %v297, %v653
        %v655 = vpop.f32.mrf.mxu0
        %656 = vmatprep.mubr.bf16.mxu0 0
        %657 = vmatmul.mubr.bf16.gmra.mxu0 %v485
        %v658 = vpop.f32.mrf.mxu0
        %v659 = vadd.f32 %v297, %v658
        %v660 = vpop.f32.mrf.mxu0
        %v661 = vpop.f32.mrf.mxu0
        %v662 = vadd.f32 %v297, %v661
        %v663 = vpop.f32.mrf.mxu0
        %664 = vmatprep.mubr.bf16.mxu0 0
        %665 = vmatmul.mubr.bf16.gmra.mxu0 %v488
        %v666 = vpop.f32.mrf.mxu0
        %v667 = vadd.f32 %v297, %v666
        %v668 = vpop.f32.mrf.mxu0
        %v669 = vpop.f32.mrf.mxu0
        %v670 = vadd.f32 %v297, %v669
        %v671 = vpop.f32.mrf.mxu0
        %672 = vmatprep.mubr.bf16.mxu0 0
        %673 = vmatmul.mubr.bf16.gmra.mxu0 %v491
        %v674 = vpop.f32.mrf.mxu0
        %v675 = vadd.f32 %v297, %v674
        %v676 = vpop.f32.mrf.mxu0
        %v677 = vpop.f32.mrf.mxu0
        %v678 = vadd.f32 %v297, %v677
        %v679 = vpop.f32.mrf.mxu0
        %680 = vmatprep.mubr.bf16.mxu0 0
        %681 = vmatmul.mubr.bf16.gmra.mxu0 %v494
        %v682 = vpop.f32.mrf.mxu0
        %v683 = vadd.f32 %v297, %v682
        %v684 = vpop.f32.mrf.mxu0
        %v685 = vpop.f32.mrf.mxu0
        %v686 = vadd.f32 %v297, %v685
        %v687 = vpop.f32.mrf.mxu0
        %688 = vmatprep.mubr.bf16.mxu0 0
        %689 = vmatmul.mubr.bf16.gmra.mxu0 %v497
        %v690 = vpop.f32.mrf.mxu0
        %v691 = vadd.f32 %v297, %v690
        %v692 = vpop.f32.mrf.mxu0
        %v693 = vpop.f32.mrf.mxu0
        %v694 = vadd.f32 %v297, %v693
        %v695 = vpop.f32.mrf.mxu0
        %696 = vmatprep.mubr.bf16.mxu0 0
        %697 = vmatmul.mubr.bf16.gmra.mxu0 %v500
        %v698 = vpop.f32.mrf.mxu0
        %v699 = vadd.f32 %v297, %v698
        %v700 = vpop.f32.mrf.mxu0
        %v701 = vpop.f32.mrf.mxu0
        %v702 = vadd.f32 %v297, %v701
        %v703 = vpop.f32.mrf.mxu0
        %704 = vmatprep.mubr.bf16.mxu0 0
        %705 = vmatmul.mubr.bf16.gmra.mxu0 %v503
        %v706 = vpop.f32.mrf.mxu0
        %v707 = vadd.f32 %v297, %v706
        %v708 = vpop.f32.mrf.mxu0
        %v709 = vpop.f32.mrf.mxu0
        %v710 = vadd.f32 %v297, %v709
        %v711 = vpop.f32.mrf.mxu0
        %712 = vmatprep.mubr.bf16.mxu0 0
        %713 = vmatmul.mubr.bf16.gmra.mxu0 %v506
        %v714 = vpop.f32.mrf.mxu0
        %v715 = vadd.f32 %v297, %v714
        %v716 = vpop.f32.mrf.mxu0
        %v717 = vpop.f32.mrf.mxu0
        %v718 = vadd.f32 %v297, %v717
        %v719 = vpop.f32.mrf.mxu0
        %720 = vmatprep.mubr.bf16.mxu0 0
        %721 = vmatmul.mubr.bf16.gmra.mxu0 %v509
        %v722 = vpop.f32.mrf.mxu0
        %v723 = vadd.f32 %v297, %v722
        %v724 = vpop.f32.mrf.mxu0
        %v725 = vpop.f32.mrf.mxu0
        %v726 = vadd.f32 %v297, %v725
        %v727 = vpop.f32.mrf.mxu0
        %728 = vmatprep.mubr.bf16.mxu0 0
        %729 = vmatmul.mubr.bf16.gmra.mxu0 %v512
        %v730 = vpop.f32.mrf.mxu0
        %v731 = vadd.f32 %v297, %v730
        %v732 = vpop.f32.mrf.mxu0
        %v733 = vpop.f32.mrf.mxu0
        %v734 = vadd.f32 %v297, %v733
        %v735 = vpop.f32.mrf.mxu0
        %736 = vmatprep.mubr.bf16.mxu0 0
        %737 = vmatmul.mubr.bf16.gmra.mxu0 %v515
        %v738 = vpop.f32.mrf.mxu0
        %v739 = vadd.f32 %v297, %v738
        %v740 = vpop.f32.mrf.mxu0
        %v741 = vpop.f32.mrf.mxu0
        %v742 = vadd.f32 %v297, %v741
        %v743 = vpop.f32.mrf.mxu0
        %744 = vmatprep.mubr.bf16.mxu0 0
        %745 = vmatmul.mubr.bf16.gmra.mxu0 %v518
        %v746 = vpop.f32.mrf.mxu0
        %v747 = vadd.f32 %v297, %v746
        %v748 = vpop.f32.mrf.mxu0
        %v749 = vpop.f32.mrf.mxu0
        %v750 = vadd.f32 %v297, %v749
        %v751 = vpop.f32.mrf.mxu0
        %752 = vmatprep.mubr.bf16.mxu0 0
        %753 = vmatmul.mubr.bf16.gmra.mxu0 %v521
        %v754 = vpop.f32.mrf.mxu0
        %v755 = vadd.f32 %v297, %v754
        %v756 = vpop.f32.mrf.mxu0
        %v757 = vpop.f32.mrf.mxu0
        %v758 = vadd.f32 %v297, %v757
        %v759 = vpop.f32.mrf.mxu0
        %760 = vmatprep.mubr.bf16.mxu0 0
        %761 = vmatmul.mubr.bf16.gmra.mxu0 %v524
        %v762 = vpop.f32.mrf.mxu0
        %v763 = vadd.f32 %v297, %v762
        %v764 = vpop.f32.mrf.mxu0
        %v765 = vpop.f32.mrf.mxu0
        %v766 = vadd.f32 %v297, %v765
        %v767 = vpop.f32.mrf.mxu0
        %768 = vmatprep.mubr.bf16.mxu0 0
        %769 = vmatmul.mubr.bf16.gmra.mxu0 %v527
        %v770 = vpop.f32.mrf.mxu0
        %v771 = vadd.f32 %v297, %v770
        %v772 = vpop.f32.mrf.mxu0
        %v773 = vpop.f32.mrf.mxu0
        %v774 = vadd.f32 %v297, %v773
        %v775 = vpop.f32.mrf.mxu0
        %776 = vmatprep.mubr.bf16.mxu0 0
        %777 = vmatmul.mubr.bf16.gmra.mxu0 %v530
        %v778 = vpop.f32.mrf.mxu0
        %v779 = vadd.f32 %v297, %v778
        %v780 = vpop.f32.mrf.mxu0
        %v781 = vpop.f32.mrf.mxu0
        %v782 = vadd.f32 %v297, %v781
        %v783 = vpop.f32.mrf.mxu0
        %784 = vmatprep.mubr.bf16.mxu0 0
        %785 = vmatmul.mubr.bf16.gmra.mxu0 %v533
        %v786 = vpop.f32.mrf.mxu0
        %v787 = vadd.f32 %v297, %v786
        %v788 = vpop.f32.mrf.mxu0
        %v789 = vpop.f32.mrf.mxu0
        %v790 = vadd.f32 %v297, %v789
        %v791 = vpop.f32.mrf.mxu0
        %792 = vmatprep.mubr.bf16.mxu0 0
        %793 = vmatmul.mubr.bf16.gmra.mxu0 %v536
        %v794 = vpop.f32.mrf.mxu0
        %v795 = vadd.f32 %v297, %v794
        %v796 = vpop.f32.mrf.mxu0
        %v797 = vpop.f32.mrf.mxu0
        %v798 = vadd.f32 %v297, %v797
        %v799 = vpop.f32.mrf.mxu0
        %800 = vmatprep.mubr.bf16.mxu0 0
        %801 = vmatmul.mubr.bf16.gmra.mxu0 %v539
        %v802 = vpop.f32.mrf.mxu0
        %v803 = vadd.f32 %v297, %v802
        %v804 = vpop.f32.mrf.mxu0
        %v805 = vpop.f32.mrf.mxu0
        %v806 = vadd.f32 %v297, %v805
        %v807 = vpop.f32.mrf.mxu0
        %808 = vmatprep.mubr.bf16.mxu0 0
        %809 = vmatmul.mubr.bf16.gmra.mxu0 %v542
        %v810 = vpop.f32.mrf.mxu0
        %v811 = vadd.f32 %v297, %v810
        %v812 = vpop.f32.mrf.mxu0
        %v813 = vpop.f32.mrf.mxu0
        %v814 = vadd.f32 %v297, %v813
        %v815 = vpop.f32.mrf.mxu0
        %816 = vmatprep.mubr.bf16.mxu0 0
        %817 = vmatmul.mubr.bf16.gmra.mxu0 %v545
        %v818 = vpop.f32.mrf.mxu0
        %v819 = vadd.f32 %v297, %v818
        %v820 = vpop.f32.mrf.mxu0
        %v821 = vpop.f32.mrf.mxu0
        %v822 = vadd.f32 %v297, %v821
        %v823 = vpop.f32.mrf.mxu0
        %824 = vmatprep.mubr.bf16.mxu0 0
        %825 = vmatmul.mubr.bf16.gmra.mxu0 %v548
        %v826 = vpop.f32.mrf.mxu0
        %v827 = vadd.f32 %v297, %v826
        %v828 = vpop.f32.mrf.mxu0
        %v829 = vpop.f32.mrf.mxu0
        %v830 = vadd.f32 %v297, %v829
        %v831 = vpop.f32.mrf.mxu0
        %832 = vmatprep.mubr.bf16.mxu0 0
        %833 = vmatmul.mubr.bf16.gmra.mxu0 %v551
        %v834 = vpop.f32.mrf.mxu0
        %v835 = vadd.f32 %v297, %v834
        %v836 = vpop.f32.mrf.mxu0
        %v837 = vpop.f32.mrf.mxu0
        %v838 = vadd.f32 %v297, %v837
        %v839 = vpop.f32.mrf.mxu0
        %840 = vmatprep.mubr.bf16.mxu0 0
        %841 = vmatmul.mubr.bf16.gmra.mxu0 %v554
        %v842 = vpop.f32.mrf.mxu0
        %v843 = vadd.f32 %v297, %v842
        %v844 = vpop.f32.mrf.mxu0
        %v845 = vpop.f32.mrf.mxu0
        %v846 = vadd.f32 %v297, %v845
        %v847 = vpop.f32.mrf.mxu0
        %848 = vdwg.mxu0
        %v849 = vmax.f32 %v595, 0.0
        %v850 = vmax.f32 %v598, 0.0
        %v851 = vmax.f32 %v603, 0.0
        %v852 = vmax.f32 %v606, 0.0
        %v853 = vmax.f32 %v611, 0.0
        %v854 = vmax.f32 %v614, 0.0
        %v855 = vmax.f32 %v619, 0.0
        %v856 = vmax.f32 %v622, 0.0
        %v857 = vmax.f32 %v627, 0.0
        %v858 = vmax.f32 %v630, 0.0
        %v859 = vmax.f32 %v635, 0.0
        %v860 = vmax.f32 %v638, 0.0
        %v861 = vmax.f32 %v643, 0.0
        %v862 = vmax.f32 %v646, 0.0
        %v863 = vmax.f32 %v651, 0.0
        %v864 = vmax.f32 %v654, 0.0
        %v865 = vmax.f32 %v659, 0.0
        %v866 = vmax.f32 %v662, 0.0
        %v867 = vmax.f32 %v667, 0.0
        %v868 = vmax.f32 %v670, 0.0
        %v869 = vmax.f32 %v675, 0.0
        %v870 = vmax.f32 %v678, 0.0
        %v871 = vmax.f32 %v683, 0.0
        %v872 = vmax.f32 %v686, 0.0
        %v873 = vmax.f32 %v691, 0.0
        %v874 = vmax.f32 %v694, 0.0
        %v875 = vmax.f32 %v699, 0.0
        %v876 = vmax.f32 %v702, 0.0
        %v877 = vmax.f32 %v707, 0.0
        %v878 = vmax.f32 %v710, 0.0
        %v879 = vmax.f32 %v715, 0.0
        %v880 = vmax.f32 %v718, 0.0
        %v881 = vmax.f32 %v723, 0.0
        %v882 = vmax.f32 %v726, 0.0
        %v883 = vmax.f32 %v731, 0.0
        %v884 = vmax.f32 %v734, 0.0
        %v885 = vmax.f32 %v739, 0.0
        %v886 = vmax.f32 %v742, 0.0
        %v887 = vmax.f32 %v747, 0.0
        %v888 = vmax.f32 %v750, 0.0
        %v889 = vmax.f32 %v755, 0.0
        %v890 = vmax.f32 %v758, 0.0
        %v891 = vmax.f32 %v763, 0.0
        %v892 = vmax.f32 %v766, 0.0
        %v893 = vmax.f32 %v771, 0.0
        %v894 = vmax.f32 %v774, 0.0
        %v895 = vmax.f32 %v779, 0.0
        %v896 = vmax.f32 %v782, 0.0
        %v897 = vmax.f32 %v787, 0.0
        %v898 = vmax.f32 %v790, 0.0
        %v899 = vmax.f32 %v795, 0.0
        %v900 = vmax.f32 %v798, 0.0
        %v901 = vmax.f32 %v803, 0.0
        %v902 = vmax.f32 %v806, 0.0
        %v903 = vmax.f32 %v811, 0.0
        %v904 = vmax.f32 %v814, 0.0
        %v905 = vmax.f32 %v819, 0.0
        %v906 = vmax.f32 %v822, 0.0
        %v907 = vmax.f32 %v827, 0.0
        %v908 = vmax.f32 %v830, 0.0
        %v909 = vmax.f32 %v835, 0.0
        %v910 = vmax.f32 %v838, 0.0
        %v911 = vmax.f32 %v843, 0.0
        %v912 = vmax.f32 %v846, 0.0
        %v913 = vpack.c.bf16 %v850, %v849
        %v914 = vpack.c.bf16 %v852, %v851
        %v915 = vpack.c.bf16 %v854, %v853
        %v916 = vpack.c.bf16 %v856, %v855
        %v917 = vpack.c.bf16 %v858, %v857
        %v918 = vpack.c.bf16 %v860, %v859
        %v919 = vpack.c.bf16 %v862, %v861
        %v920 = vpack.c.bf16 %v864, %v863
        %v921 = vpack.c.bf16 %v866, %v865
        %v922 = vpack.c.bf16 %v868, %v867
        %v923 = vpack.c.bf16 %v870, %v869
        %v924 = vpack.c.bf16 %v872, %v871
        %v925 = vpack.c.bf16 %v874, %v873
        %v926 = vpack.c.bf16 %v876, %v875
        %v927 = vpack.c.bf16 %v878, %v877
        %v928 = vpack.c.bf16 %v880, %v879
        %v929 = vpack.c.bf16 %v882, %v881
        %v930 = vpack.c.bf16 %v884, %v883
        %v931 = vpack.c.bf16 %v886, %v885
        %v932 = vpack.c.bf16 %v888, %v887
        %v933 = vpack.c.bf16 %v890, %v889
        %v934 = vpack.c.bf16 %v892, %v891
        %v935 = vpack.c.bf16 %v894, %v893
        %v936 = vpack.c.bf16 %v896, %v895
        %v937 = vpack.c.bf16 %v898, %v897
        %v938 = vpack.c.bf16 %v900, %v899
        %v939 = vpack.c.bf16 %v902, %v901
        %v940 = vpack.c.bf16 %v904, %v903
        %v941 = vpack.c.bf16 %v906, %v905
        %v942 = vpack.c.bf16 %v908, %v907
        %v943 = vpack.c.bf16 %v910, %v909
        %v944 = vpack.c.bf16 %v912, %v911
        %v945 = vld [vmem:[%s3] sm:$0xf]
        %v946 = vld [vmem:[%s3 + $0x4] sm:$0xf]
        %v947 = vld [vmem:[%s3 + $0x8] sm:$0xf]
        %v948 = vld [vmem:[%s3 + $0xc] sm:$0xf]
        %v949 = vld [vmem:[%s4] sm:$0x1]
        %v951 = vlaneseq
        %v952 = vshrl.u32 %v951, 7
        %v953 = vsub.s32 0, %v952
        %v954 = vrot.slane %v949, %v953
        %v960 = vunpack.c.l.b16 %v945
        %v961 = vunpack.c.l.b16 %v946
        %v962 = vunpack.c.l.b16 %v947
        %v963 = vunpack.c.l.b16 %v948
        %v964 = vpack.c.b16 %v961, %v960
        %v965 = vpack.c.b16 %v963, %v962
        %vm968 = vcmask 261120
        %v970 = vsel %vm968, %v913, 0
        %v973 = vsel %vm968, %v914, 0
        %v976 = vsel %vm968, %v915, 0
        %v979 = vsel %vm968, %v916, 0
        %v982 = vsel %vm968, %v917, 0
        %v985 = vsel %vm968, %v918, 0
        %v988 = vsel %vm968, %v919, 0
        %v991 = vsel %vm968, %v920, 0
        %v994 = vsel %vm968, %v921, 0
        %v997 = vsel %vm968, %v922, 0
        %v1000 = vsel %vm968, %v923, 0
        %v1003 = vsel %vm968, %v924, 0
        %v1006 = vsel %vm968, %v925, 0
        %v1009 = vsel %vm968, %v926, 0
        %v1012 = vsel %vm968, %v927, 0
        %v1015 = vsel %vm968, %v928, 0
        %v1018 = vsel %vm968, %v929, 0
        %v1021 = vsel %vm968, %v930, 0
        %v1024 = vsel %vm968, %v931, 0
        %v1027 = vsel %vm968, %v932, 0
        %v1030 = vsel %vm968, %v933, 0
        %v1033 = vsel %vm968, %v934, 0
        %v1036 = vsel %vm968, %v935, 0
        %v1039 = vsel %vm968, %v936, 0
        %v1042 = vsel %vm968, %v937, 0
        %v1045 = vsel %vm968, %v938, 0
        %v1048 = vsel %vm968, %v939, 0
        %v1051 = vsel %vm968, %v940, 0
        %v1054 = vsel %vm968, %v941, 0
        %v1057 = vsel %vm968, %v942, 0
        %v1060 = vsel %vm968, %v943, 0
        %v1063 = vsel %vm968, %v944, 0
        %1065 = vmatprep.subr.bf16.mxu0 0
        %1066 = vmatpush1.bf16.msra.mxu0 0
        %1067 = vmatprep.subr.bf16.mxu0 0
        %1068 = vmatpush1.bf16.msra.mxu0 0
        %1069 = vmatprep.subr.bf16.mxu0 0
        %1070 = vmatpush1.bf16.msra.mxu0 0
        %1071 = vmatprep.subr.bf16.mxu0 0
        %1072 = vmatpush1.bf16.msra.mxu0 0
        %1073 = vmatprep.subr.bf16.mxu0 0
        %1074 = vmatpush1.bf16.msra.mxu0 0
        %1075 = vmatprep.subr.bf16.mxu0 0
        %1076 = vmatpush1.bf16.msra.mxu0 0
        %1077 = vmatprep.subr.bf16.mxu0 0
        %1078 = vmatpush1.bf16.msra.mxu0 %v965
        %1079 = vmatprep.subr.bf16.mxu0 0
        %1080 = vmatpush1.bf16.msra.mxu0 %v964
        %1081 = vmatprep.subr.bf16.mxu0 0
        %1082 = vmatpush2.bf16.msra.mxu0 0
        %1083 = vmatprep.subr.bf16.mxu0 0
        %1084 = vmatpush2.bf16.msra.mxu0 0
        %1085 = vmatprep.subr.bf16.mxu0 0
        %1086 = vmatpush2.bf16.msra.mxu0 0
        %1087 = vmatprep.subr.bf16.mxu0 0
        %1088 = vmatpush2.bf16.msra.mxu0 0
        %1089 = vmatprep.subr.bf16.mxu0 0
        %1090 = vmatpush2.bf16.msra.mxu0 0
        %1091 = vmatprep.subr.bf16.mxu0 0
        %1092 = vmatpush2.bf16.msra.mxu0 0
        %1093 = vmatprep.subr.bf16.mxu0 0
        %1094 = vmatpush2.bf16.msra.mxu0 0
        %1095 = vmatprep.subr.bf16.mxu0 0
        %1096 = vmatpush2.bf16.msra.mxu0 0
        %1097 = vmatprep.mubr.bf16.mxu0 0
        %1098 = vmatmul.mubr.bf16.gmra.mxu0 %v970
        %v1099 = vpop.f32.mrf.mxu0
        %v1100 = vadd.f32 %v954, %v1099
        %v1101 = vpop.f32.mrf.mxu0
        %v1102 = vpop.f32.mrf.mxu0
        %v1103 = vadd.f32 %v954, %v1102
        %v1104 = vpop.f32.mrf.mxu0
        %1105 = vmatprep.mubr.bf16.mxu0 0
        %1106 = vmatmul.mubr.bf16.gmra.mxu0 %v973
        %v1107 = vpop.f32.mrf.mxu0
        %v1108 = vadd.f32 %v954, %v1107
        %v1109 = vpop.f32.mrf.mxu0
        %v1110 = vpop.f32.mrf.mxu0
        %v1111 = vadd.f32 %v954, %v1110
        %v1112 = vpop.f32.mrf.mxu0
        %1113 = vmatprep.mubr.bf16.mxu0 0
        %1114 = vmatmul.mubr.bf16.gmra.mxu0 %v976
        %v1115 = vpop.f32.mrf.mxu0
        %v1116 = vadd.f32 %v954, %v1115
        %v1117 = vpop.f32.mrf.mxu0
        %v1118 = vpop.f32.mrf.mxu0
        %v1119 = vadd.f32 %v954, %v1118
        %v1120 = vpop.f32.mrf.mxu0
        %1121 = vmatprep.mubr.bf16.mxu0 0
        %1122 = vmatmul.mubr.bf16.gmra.mxu0 %v979
        %v1123 = vpop.f32.mrf.mxu0
        %v1124 = vadd.f32 %v954, %v1123
        %v1125 = vpop.f32.mrf.mxu0
        %v1126 = vpop.f32.mrf.mxu0
        %v1127 = vadd.f32 %v954, %v1126
        %v1128 = vpop.f32.mrf.mxu0
        %1129 = vmatprep.mubr.bf16.mxu0 0
        %1130 = vmatmul.mubr.bf16.gmra.mxu0 %v982
        %v1131 = vpop.f32.mrf.mxu0
        %v1132 = vadd.f32 %v954, %v1131
        %v1133 = vpop.f32.mrf.mxu0
        %v1134 = vpop.f32.mrf.mxu0
        %v1135 = vadd.f32 %v954, %v1134
        %v1136 = vpop.f32.mrf.mxu0
        %1137 = vmatprep.mubr.bf16.mxu0 0
        %1138 = vmatmul.mubr.bf16.gmra.mxu0 %v985
        %v1139 = vpop.f32.mrf.mxu0
        %v1140 = vadd.f32 %v954, %v1139
        %v1141 = vpop.f32.mrf.mxu0
        %v1142 = vpop.f32.mrf.mxu0
        %v1143 = vadd.f32 %v954, %v1142
        %v1144 = vpop.f32.mrf.mxu0
        %1145 = vmatprep.mubr.bf16.mxu0 0
        %1146 = vmatmul.mubr.bf16.gmra.mxu0 %v988
        %v1147 = vpop.f32.mrf.mxu0
        %v1148 = vadd.f32 %v954, %v1147
        %v1149 = vpop.f32.mrf.mxu0
        %v1150 = vpop.f32.mrf.mxu0
        %v1151 = vadd.f32 %v954, %v1150
        %v1152 = vpop.f32.mrf.mxu0
        %1153 = vmatprep.mubr.bf16.mxu0 0
        %1154 = vmatmul.mubr.bf16.gmra.mxu0 %v991
        %v1155 = vpop.f32.mrf.mxu0
        %v1156 = vadd.f32 %v954, %v1155
        %v1157 = vpop.f32.mrf.mxu0
        %v1158 = vpop.f32.mrf.mxu0
        %v1159 = vadd.f32 %v954, %v1158
        %v1160 = vpop.f32.mrf.mxu0
        %1161 = vmatprep.mubr.bf16.mxu0 0
        %1162 = vmatmul.mubr.bf16.gmra.mxu0 %v994
        %v1163 = vpop.f32.mrf.mxu0
        %v1164 = vadd.f32 %v954, %v1163
        %v1165 = vpop.f32.mrf.mxu0
        %v1166 = vpop.f32.mrf.mxu0
        %v1167 = vadd.f32 %v954, %v1166
        %v1168 = vpop.f32.mrf.mxu0
        %1169 = vmatprep.mubr.bf16.mxu0 0
        %1170 = vmatmul.mubr.bf16.gmra.mxu0 %v997
        %v1171 = vpop.f32.mrf.mxu0
        %v1172 = vadd.f32 %v954, %v1171
        %v1173 = vpop.f32.mrf.mxu0
        %v1174 = vpop.f32.mrf.mxu0
        %v1175 = vadd.f32 %v954, %v1174
        %v1176 = vpop.f32.mrf.mxu0
        %1177 = vmatprep.mubr.bf16.mxu0 0
        %1178 = vmatmul.mubr.bf16.gmra.mxu0 %v1000
        %v1179 = vpop.f32.mrf.mxu0
        %v1180 = vadd.f32 %v954, %v1179
        %v1181 = vpop.f32.mrf.mxu0
        %v1182 = vpop.f32.mrf.mxu0
        %v1183 = vadd.f32 %v954, %v1182
        %v1184 = vpop.f32.mrf.mxu0
        %1185 = vmatprep.mubr.bf16.mxu0 0
        %1186 = vmatmul.mubr.bf16.gmra.mxu0 %v1003
        %v1187 = vpop.f32.mrf.mxu0
        %v1188 = vadd.f32 %v954, %v1187
        %v1189 = vpop.f32.mrf.mxu0
        %v1190 = vpop.f32.mrf.mxu0
        %v1191 = vadd.f32 %v954, %v1190
        %v1192 = vpop.f32.mrf.mxu0
        %1193 = vmatprep.mubr.bf16.mxu0 0
        %1194 = vmatmul.mubr.bf16.gmra.mxu0 %v1006
        %v1195 = vpop.f32.mrf.mxu0
        %v1196 = vadd.f32 %v954, %v1195
        %v1197 = vpop.f32.mrf.mxu0
        %v1198 = vpop.f32.mrf.mxu0
        %v1199 = vadd.f32 %v954, %v1198
        %v1200 = vpop.f32.mrf.mxu0
        %1201 = vmatprep.mubr.bf16.mxu0 0
        %1202 = vmatmul.mubr.bf16.gmra.mxu0 %v1009
        %v1203 = vpop.f32.mrf.mxu0
        %v1204 = vadd.f32 %v954, %v1203
        %v1205 = vpop.f32.mrf.mxu0
        %v1206 = vpop.f32.mrf.mxu0
        %v1207 = vadd.f32 %v954, %v1206
        %v1208 = vpop.f32.mrf.mxu0
        %1209 = vmatprep.mubr.bf16.mxu0 0
        %1210 = vmatmul.mubr.bf16.gmra.mxu0 %v1012
        %v1211 = vpop.f32.mrf.mxu0
        %v1212 = vadd.f32 %v954, %v1211
        %v1213 = vpop.f32.mrf.mxu0
        %v1214 = vpop.f32.mrf.mxu0
        %v1215 = vadd.f32 %v954, %v1214
        %v1216 = vpop.f32.mrf.mxu0
        %1217 = vmatprep.mubr.bf16.mxu0 0
        %1218 = vmatmul.mubr.bf16.gmra.mxu0 %v1015
        %v1219 = vpop.f32.mrf.mxu0
        %v1220 = vadd.f32 %v954, %v1219
        %v1221 = vpop.f32.mrf.mxu0
        %v1222 = vpop.f32.mrf.mxu0
        %v1223 = vadd.f32 %v954, %v1222
        %v1224 = vpop.f32.mrf.mxu0
        %1225 = vmatprep.mubr.bf16.mxu0 0
        %1226 = vmatmul.mubr.bf16.gmra.mxu0 %v1018
        %v1227 = vpop.f32.mrf.mxu0
        %v1228 = vadd.f32 %v954, %v1227
        %v1229 = vpop.f32.mrf.mxu0
        %v1230 = vpop.f32.mrf.mxu0
        %v1231 = vadd.f32 %v954, %v1230
        %v1232 = vpop.f32.mrf.mxu0
        %1233 = vmatprep.mubr.bf16.mxu0 0
        %1234 = vmatmul.mubr.bf16.gmra.mxu0 %v1021
        %v1235 = vpop.f32.mrf.mxu0
        %v1236 = vadd.f32 %v954, %v1235
        %v1237 = vpop.f32.mrf.mxu0
        %v1238 = vpop.f32.mrf.mxu0
        %v1239 = vadd.f32 %v954, %v1238
        %v1240 = vpop.f32.mrf.mxu0
        %1241 = vmatprep.mubr.bf16.mxu0 0
        %1242 = vmatmul.mubr.bf16.gmra.mxu0 %v1024
        %v1243 = vpop.f32.mrf.mxu0
        %v1244 = vadd.f32 %v954, %v1243
        %v1245 = vpop.f32.mrf.mxu0
        %v1246 = vpop.f32.mrf.mxu0
        %v1247 = vadd.f32 %v954, %v1246
        %v1248 = vpop.f32.mrf.mxu0
        %1249 = vmatprep.mubr.bf16.mxu0 0
        %1250 = vmatmul.mubr.bf16.gmra.mxu0 %v1027
        %v1251 = vpop.f32.mrf.mxu0
        %v1252 = vadd.f32 %v954, %v1251
        %v1253 = vpop.f32.mrf.mxu0
        %v1254 = vpop.f32.mrf.mxu0
        %v1255 = vadd.f32 %v954, %v1254
        %v1256 = vpop.f32.mrf.mxu0
        %1257 = vmatprep.mubr.bf16.mxu0 0
        %1258 = vmatmul.mubr.bf16.gmra.mxu0 %v1030
        %v1259 = vpop.f32.mrf.mxu0
        %v1260 = vadd.f32 %v954, %v1259
        %v1261 = vpop.f32.mrf.mxu0
        %v1262 = vpop.f32.mrf.mxu0
        %v1263 = vadd.f32 %v954, %v1262
        %v1264 = vpop.f32.mrf.mxu0
        %1265 = vmatprep.mubr.bf16.mxu0 0
        %1266 = vmatmul.mubr.bf16.gmra.mxu0 %v1033
        %v1267 = vpop.f32.mrf.mxu0
        %v1268 = vadd.f32 %v954, %v1267
        %v1269 = vpop.f32.mrf.mxu0
        %v1270 = vpop.f32.mrf.mxu0
        %v1271 = vadd.f32 %v954, %v1270
        %v1272 = vpop.f32.mrf.mxu0
        %1273 = vmatprep.mubr.bf16.mxu0 0
        %1274 = vmatmul.mubr.bf16.gmra.mxu0 %v1036
        %v1275 = vpop.f32.mrf.mxu0
        %v1276 = vadd.f32 %v954, %v1275
        %v1277 = vpop.f32.mrf.mxu0
        %v1278 = vpop.f32.mrf.mxu0
        %v1279 = vadd.f32 %v954, %v1278
        %v1280 = vpop.f32.mrf.mxu0
        %1281 = vmatprep.mubr.bf16.mxu0 0
        %1282 = vmatmul.mubr.bf16.gmra.mxu0 %v1039
        %v1283 = vpop.f32.mrf.mxu0
        %v1284 = vadd.f32 %v954, %v1283
        %v1285 = vpop.f32.mrf.mxu0
        %v1286 = vpop.f32.mrf.mxu0
        %v1287 = vadd.f32 %v954, %v1286
        %v1288 = vpop.f32.mrf.mxu0
        %1289 = vmatprep.mubr.bf16.mxu0 0
        %1290 = vmatmul.mubr.bf16.gmra.mxu0 %v1042
        %v1291 = vpop.f32.mrf.mxu0
        %v1292 = vadd.f32 %v954, %v1291
        %v1293 = vpop.f32.mrf.mxu0
        %v1294 = vpop.f32.mrf.mxu0
        %v1295 = vadd.f32 %v954, %v1294
        %v1296 = vpop.f32.mrf.mxu0
        %1297 = vmatprep.mubr.bf16.mxu0 0
        %1298 = vmatmul.mubr.bf16.gmra.mxu0 %v1045
        %v1299 = vpop.f32.mrf.mxu0
        %v1300 = vadd.f32 %v954, %v1299
        %v1301 = vpop.f32.mrf.mxu0
        %v1302 = vpop.f32.mrf.mxu0
        %v1303 = vadd.f32 %v954, %v1302
        %v1304 = vpop.f32.mrf.mxu0
        %1305 = vmatprep.mubr.bf16.mxu0 0
        %1306 = vmatmul.mubr.bf16.gmra.mxu0 %v1048
        %v1307 = vpop.f32.mrf.mxu0
        %v1308 = vadd.f32 %v954, %v1307
        %v1309 = vpop.f32.mrf.mxu0
        %v1310 = vpop.f32.mrf.mxu0
        %v1311 = vadd.f32 %v954, %v1310
        %v1312 = vpop.f32.mrf.mxu0
        %1313 = vmatprep.mubr.bf16.mxu0 0
        %1314 = vmatmul.mubr.bf16.gmra.mxu0 %v1051
        %v1315 = vpop.f32.mrf.mxu0
        %v1316 = vadd.f32 %v954, %v1315
        %v1317 = vpop.f32.mrf.mxu0
        %v1318 = vpop.f32.mrf.mxu0
        %v1319 = vadd.f32 %v954, %v1318
        %v1320 = vpop.f32.mrf.mxu0
        %1321 = vmatprep.mubr.bf16.mxu0 0
        %1322 = vmatmul.mubr.bf16.gmra.mxu0 %v1054
        %v1323 = vpop.f32.mrf.mxu0
        %v1324 = vadd.f32 %v954, %v1323
        %v1325 = vpop.f32.mrf.mxu0
        %v1326 = vpop.f32.mrf.mxu0
        %v1327 = vadd.f32 %v954, %v1326
        %v1328 = vpop.f32.mrf.mxu0
        %1329 = vmatprep.mubr.bf16.mxu0 0
        %1330 = vmatmul.mubr.bf16.gmra.mxu0 %v1057
        %v1331 = vpop.f32.mrf.mxu0
        %v1332 = vadd.f32 %v954, %v1331
        %v1333 = vpop.f32.mrf.mxu0
        %v1334 = vpop.f32.mrf.mxu0
        %v1335 = vadd.f32 %v954, %v1334
        %v1336 = vpop.f32.mrf.mxu0
        %1337 = vmatprep.mubr.bf16.mxu0 0
        %1338 = vmatmul.mubr.bf16.gmra.mxu0 %v1060
        %v1339 = vpop.f32.mrf.mxu0
        %v1340 = vadd.f32 %v954, %v1339
        %v1341 = vpop.f32.mrf.mxu0
        %v1342 = vpop.f32.mrf.mxu0
        %v1343 = vadd.f32 %v954, %v1342
        %v1344 = vpop.f32.mrf.mxu0
        %1345 = vmatprep.mubr.bf16.mxu0 0
        %1346 = vmatmul.mubr.bf16.gmra.mxu0 %v1063
        %v1347 = vpop.f32.mrf.mxu0
        %v1348 = vadd.f32 %v954, %v1347
        %v1349 = vpop.f32.mrf.mxu0
        %v1350 = vpop.f32.mrf.mxu0
        %v1351 = vadd.f32 %v954, %v1350
        %v1352 = vpop.f32.mrf.mxu0
        %1353 = vdwg.mxu0
        %v1354 = vmax.f32 %v1100, 0.0
        %v1355 = vmax.f32 %v1103, 0.0
        %v1356 = vmax.f32 %v1108, 0.0
        %v1357 = vmax.f32 %v1111, 0.0
        %v1358 = vmax.f32 %v1116, 0.0
        %v1359 = vmax.f32 %v1119, 0.0
        %v1360 = vmax.f32 %v1124, 0.0
        %v1361 = vmax.f32 %v1127, 0.0
        %v1362 = vmax.f32 %v1132, 0.0
        %v1363 = vmax.f32 %v1135, 0.0
        %v1364 = vmax.f32 %v1140, 0.0
        %v1365 = vmax.f32 %v1143, 0.0
        %v1366 = vmax.f32 %v1148, 0.0
        %v1367 = vmax.f32 %v1151, 0.0
        %v1368 = vmax.f32 %v1156, 0.0
        %v1369 = vmax.f32 %v1159, 0.0
        %v1370 = vmax.f32 %v1164, 0.0
        %v1371 = vmax.f32 %v1167, 0.0
        %v1372 = vmax.f32 %v1172, 0.0
        %v1373 = vmax.f32 %v1175, 0.0
        %v1374 = vmax.f32 %v1180, 0.0
        %v1375 = vmax.f32 %v1183, 0.0
        %v1376 = vmax.f32 %v1188, 0.0
        %v1377 = vmax.f32 %v1191, 0.0
        %v1378 = vmax.f32 %v1196, 0.0
        %v1379 = vmax.f32 %v1199, 0.0
        %v1380 = vmax.f32 %v1204, 0.0
        %v1381 = vmax.f32 %v1207, 0.0
        %v1382 = vmax.f32 %v1212, 0.0
        %v1383 = vmax.f32 %v1215, 0.0
        %v1384 = vmax.f32 %v1220, 0.0
        %v1385 = vmax.f32 %v1223, 0.0
        %v1386 = vmax.f32 %v1228, 0.0
        %v1387 = vmax.f32 %v1231, 0.0
        %v1388 = vmax.f32 %v1236, 0.0
        %v1389 = vmax.f32 %v1239, 0.0
        %v1390 = vmax.f32 %v1244, 0.0
        %v1391 = vmax.f32 %v1247, 0.0
        %v1392 = vmax.f32 %v1252, 0.0
        %v1393 = vmax.f32 %v1255, 0.0
        %v1394 = vmax.f32 %v1260, 0.0
        %v1395 = vmax.f32 %v1263, 0.0
        %v1396 = vmax.f32 %v1268, 0.0
        %v1397 = vmax.f32 %v1271, 0.0
        %v1398 = vmax.f32 %v1276, 0.0
        %v1399 = vmax.f32 %v1279, 0.0
        %v1400 = vmax.f32 %v1284, 0.0
        %v1401 = vmax.f32 %v1287, 0.0
        %v1402 = vmax.f32 %v1292, 0.0
        %v1403 = vmax.f32 %v1295, 0.0
        %v1404 = vmax.f32 %v1300, 0.0
        %v1405 = vmax.f32 %v1303, 0.0
        %v1406 = vmax.f32 %v1308, 0.0
        %v1407 = vmax.f32 %v1311, 0.0
        %v1408 = vmax.f32 %v1316, 0.0
        %v1409 = vmax.f32 %v1319, 0.0
        %v1410 = vmax.f32 %v1324, 0.0
        %v1411 = vmax.f32 %v1327, 0.0
        %v1412 = vmax.f32 %v1332, 0.0
        %v1413 = vmax.f32 %v1335, 0.0
        %v1414 = vmax.f32 %v1340, 0.0
        %v1415 = vmax.f32 %v1343, 0.0
        %v1416 = vmax.f32 %v1348, 0.0
        %v1417 = vmax.f32 %v1351, 0.0
        %vm1418 = vcmask 523264
        %v1419 = vsel %vm1418, %v1354, -inf
        %v1420 = vsel %vm1418, %v1355, -inf
        %v1421 = vmax.f32 %v1419, %v1420
        %v1422 = vrot.slane %v1421, 4
        %v1423 = vmax.f32 %v1421, %v1422
        %v1424 = vrot.slane %v1423, 2
        %v1425 = vmax.f32 %v1423, %v1424
        %v1426 = vrot.slane %v1425, 1
        %v1427 = vmax.f32 %v1425, %v1426
        %v1428 = vsel %vm1418, %v1356, -inf
        %v1429 = vsel %vm1418, %v1357, -inf
        %v1430 = vmax.f32 %v1428, %v1429
        %v1431 = vrot.slane %v1430, 4
        %v1432 = vmax.f32 %v1430, %v1431
        %v1433 = vrot.slane %v1432, 2
        %v1434 = vmax.f32 %v1432, %v1433
        %v1435 = vrot.slane %v1434, 1
        %v1436 = vmax.f32 %v1434, %v1435
        %v1437 = vsel %vm1418, %v1358, -inf
        %v1438 = vsel %vm1418, %v1359, -inf
        %v1439 = vmax.f32 %v1437, %v1438
        %v1440 = vrot.slane %v1439, 4
        %v1441 = vmax.f32 %v1439, %v1440
        %v1442 = vrot.slane %v1441, 2
        %v1443 = vmax.f32 %v1441, %v1442
        %v1444 = vrot.slane %v1443, 1
        %v1445 = vmax.f32 %v1443, %v1444
        %v1446 = vsel %vm1418, %v1360, -inf
        %v1447 = vsel %vm1418, %v1361, -inf
        %v1448 = vmax.f32 %v1446, %v1447
        %v1449 = vrot.slane %v1448, 4
        %v1450 = vmax.f32 %v1448, %v1449
        %v1451 = vrot.slane %v1450, 2
        %v1452 = vmax.f32 %v1450, %v1451
        %v1453 = vrot.slane %v1452, 1
        %v1454 = vmax.f32 %v1452, %v1453
        %v1455 = vsel %vm1418, %v1362, -inf
        %v1456 = vsel %vm1418, %v1363, -inf
        %v1457 = vmax.f32 %v1455, %v1456
        %v1458 = vrot.slane %v1457, 4
        %v1459 = vmax.f32 %v1457, %v1458
        %v1460 = vrot.slane %v1459, 2
        %v1461 = vmax.f32 %v1459, %v1460
        %v1462 = vrot.slane %v1461, 1
        %v1463 = vmax.f32 %v1461, %v1462
        %v1464 = vsel %vm1418, %v1364, -inf
        %v1465 = vsel %vm1418, %v1365, -inf
        %v1466 = vmax.f32 %v1464, %v1465
        %v1467 = vrot.slane %v1466, 4
        %v1468 = vmax.f32 %v1466, %v1467
        %v1469 = vrot.slane %v1468, 2
        %v1470 = vmax.f32 %v1468, %v1469
        %v1471 = vrot.slane %v1470, 1
        %v1472 = vmax.f32 %v1470, %v1471
        %v1473 = vsel %vm1418, %v1366, -inf
        %v1474 = vsel %vm1418, %v1367, -inf
        %v1475 = vmax.f32 %v1473, %v1474
        %v1476 = vrot.slane %v1475, 4
        %v1477 = vmax.f32 %v1475, %v1476
        %v1478 = vrot.slane %v1477, 2
        %v1479 = vmax.f32 %v1477, %v1478
        %v1480 = vrot.slane %v1479, 1
        %v1481 = vmax.f32 %v1479, %v1480
        %v1482 = vsel %vm1418, %v1368, -inf
        %v1483 = vsel %vm1418, %v1369, -inf
        %v1484 = vmax.f32 %v1482, %v1483
        %v1485 = vrot.slane %v1484, 4
        %v1486 = vmax.f32 %v1484, %v1485
        %v1487 = vrot.slane %v1486, 2
        %v1488 = vmax.f32 %v1486, %v1487
        %v1489 = vrot.slane %v1488, 1
        %v1490 = vmax.f32 %v1488, %v1489
        %v1491 = vsel %vm1418, %v1370, -inf
        %v1492 = vsel %vm1418, %v1371, -inf
        %v1493 = vmax.f32 %v1491, %v1492
        %v1494 = vrot.slane %v1493, 4
        %v1495 = vmax.f32 %v1493, %v1494
        %v1496 = vrot.slane %v1495, 2
        %v1497 = vmax.f32 %v1495, %v1496
        %v1498 = vrot.slane %v1497, 1
        %v1499 = vmax.f32 %v1497, %v1498
        %v1500 = vsel %vm1418, %v1372, -inf
        %v1501 = vsel %vm1418, %v1373, -inf
        %v1502 = vmax.f32 %v1500, %v1501
        %v1503 = vrot.slane %v1502, 4
        %v1504 = vmax.f32 %v1502, %v1503
        %v1505 = vrot.slane %v1504, 2
        %v1506 = vmax.f32 %v1504, %v1505
        %v1507 = vrot.slane %v1506, 1
        %v1508 = vmax.f32 %v1506, %v1507
        %v1509 = vsel %vm1418, %v1374, -inf
        %v1510 = vsel %vm1418, %v1375, -inf
        %v1511 = vmax.f32 %v1509, %v1510
        %v1512 = vrot.slane %v1511, 4
        %v1513 = vmax.f32 %v1511, %v1512
        %v1514 = vrot.slane %v1513, 2
        %v1515 = vmax.f32 %v1513, %v1514
        %v1516 = vrot.slane %v1515, 1
        %v1517 = vmax.f32 %v1515, %v1516
        %v1518 = vsel %vm1418, %v1376, -inf
        %v1519 = vsel %vm1418, %v1377, -inf
        %v1520 = vmax.f32 %v1518, %v1519
        %v1521 = vrot.slane %v1520, 4
        %v1522 = vmax.f32 %v1520, %v1521
        %v1523 = vrot.slane %v1522, 2
        %v1524 = vmax.f32 %v1522, %v1523
        %v1525 = vrot.slane %v1524, 1
        %v1526 = vmax.f32 %v1524, %v1525
        %v1527 = vsel %vm1418, %v1378, -inf
        %v1528 = vsel %vm1418, %v1379, -inf
        %v1529 = vmax.f32 %v1527, %v1528
        %v1530 = vrot.slane %v1529, 4
        %v1531 = vmax.f32 %v1529, %v1530
        %v1532 = vrot.slane %v1531, 2
        %v1533 = vmax.f32 %v1531, %v1532
        %v1534 = vrot.slane %v1533, 1
        %v1535 = vmax.f32 %v1533, %v1534
        %v1536 = vsel %vm1418, %v1380, -inf
        %v1537 = vsel %vm1418, %v1381, -inf
        %v1538 = vmax.f32 %v1536, %v1537
        %v1539 = vrot.slane %v1538, 4
        %v1540 = vmax.f32 %v1538, %v1539
        %v1541 = vrot.slane %v1540, 2
        %v1542 = vmax.f32 %v1540, %v1541
        %v1543 = vrot.slane %v1542, 1
        %v1544 = vmax.f32 %v1542, %v1543
        %v1545 = vsel %vm1418, %v1382, -inf
        %v1546 = vsel %vm1418, %v1383, -inf
        %v1547 = vmax.f32 %v1545, %v1546
        %v1548 = vrot.slane %v1547, 4
        %v1549 = vmax.f32 %v1547, %v1548
        %v1550 = vrot.slane %v1549, 2
        %v1551 = vmax.f32 %v1549, %v1550
        %v1552 = vrot.slane %v1551, 1
        %v1553 = vmax.f32 %v1551, %v1552
        %v1554 = vsel %vm1418, %v1384, -inf
        %v1555 = vsel %vm1418, %v1385, -inf
        %v1556 = vmax.f32 %v1554, %v1555
        %v1557 = vrot.slane %v1556, 4
        %v1558 = vmax.f32 %v1556, %v1557
        %v1559 = vrot.slane %v1558, 2
        %v1560 = vmax.f32 %v1558, %v1559
        %v1561 = vrot.slane %v1560, 1
        %v1562 = vmax.f32 %v1560, %v1561
        %v1563 = vsel %vm1418, %v1386, -inf
        %v1564 = vsel %vm1418, %v1387, -inf
        %v1565 = vmax.f32 %v1563, %v1564
        %v1566 = vrot.slane %v1565, 4
        %v1567 = vmax.f32 %v1565, %v1566
        %v1568 = vrot.slane %v1567, 2
        %v1569 = vmax.f32 %v1567, %v1568
        %v1570 = vrot.slane %v1569, 1
        %v1571 = vmax.f32 %v1569, %v1570
        %v1572 = vsel %vm1418, %v1388, -inf
        %v1573 = vsel %vm1418, %v1389, -inf
        %v1574 = vmax.f32 %v1572, %v1573
        %v1575 = vrot.slane %v1574, 4
        %v1576 = vmax.f32 %v1574, %v1575
        %v1577 = vrot.slane %v1576, 2
        %v1578 = vmax.f32 %v1576, %v1577
        %v1579 = vrot.slane %v1578, 1
        %v1580 = vmax.f32 %v1578, %v1579
        %v1581 = vsel %vm1418, %v1390, -inf
        %v1582 = vsel %vm1418, %v1391, -inf
        %v1583 = vmax.f32 %v1581, %v1582
        %v1584 = vrot.slane %v1583, 4
        %v1585 = vmax.f32 %v1583, %v1584
        %v1586 = vrot.slane %v1585, 2
        %v1587 = vmax.f32 %v1585, %v1586
        %v1588 = vrot.slane %v1587, 1
        %v1589 = vmax.f32 %v1587, %v1588
        %v1590 = vsel %vm1418, %v1392, -inf
        %v1591 = vsel %vm1418, %v1393, -inf
        %v1592 = vmax.f32 %v1590, %v1591
        %v1593 = vrot.slane %v1592, 4
        %v1594 = vmax.f32 %v1592, %v1593
        %v1595 = vrot.slane %v1594, 2
        %v1596 = vmax.f32 %v1594, %v1595
        %v1597 = vrot.slane %v1596, 1
        %v1598 = vmax.f32 %v1596, %v1597
        %v1599 = vsel %vm1418, %v1394, -inf
        %v1600 = vsel %vm1418, %v1395, -inf
        %v1601 = vmax.f32 %v1599, %v1600
        %v1602 = vrot.slane %v1601, 4
        %v1603 = vmax.f32 %v1601, %v1602
        %v1604 = vrot.slane %v1603, 2
        %v1605 = vmax.f32 %v1603, %v1604
        %v1606 = vrot.slane %v1605, 1
        %v1607 = vmax.f32 %v1605, %v1606
        %v1608 = vsel %vm1418, %v1396, -inf
        %v1609 = vsel %vm1418, %v1397, -inf
        %v1610 = vmax.f32 %v1608, %v1609
        %v1611 = vrot.slane %v1610, 4
        %v1612 = vmax.f32 %v1610, %v1611
        %v1613 = vrot.slane %v1612, 2
        %v1614 = vmax.f32 %v1612, %v1613
        %v1615 = vrot.slane %v1614, 1
        %v1616 = vmax.f32 %v1614, %v1615
        %v1617 = vsel %vm1418, %v1398, -inf
        %v1618 = vsel %vm1418, %v1399, -inf
        %v1619 = vmax.f32 %v1617, %v1618
        %v1620 = vrot.slane %v1619, 4
        %v1621 = vmax.f32 %v1619, %v1620
        %v1622 = vrot.slane %v1621, 2
        %v1623 = vmax.f32 %v1621, %v1622
        %v1624 = vrot.slane %v1623, 1
        %v1625 = vmax.f32 %v1623, %v1624
        %v1626 = vsel %vm1418, %v1400, -inf
        %v1627 = vsel %vm1418, %v1401, -inf
        %v1628 = vmax.f32 %v1626, %v1627
        %v1629 = vrot.slane %v1628, 4
        %v1630 = vmax.f32 %v1628, %v1629
        %v1631 = vrot.slane %v1630, 2
        %v1632 = vmax.f32 %v1630, %v1631
        %v1633 = vrot.slane %v1632, 1
        %v1634 = vmax.f32 %v1632, %v1633
        %v1635 = vsel %vm1418, %v1402, -inf
        %v1636 = vsel %vm1418, %v1403, -inf
        %v1637 = vmax.f32 %v1635, %v1636
        %v1638 = vrot.slane %v1637, 4
        %v1639 = vmax.f32 %v1637, %v1638
        %v1640 = vrot.slane %v1639, 2
        %v1641 = vmax.f32 %v1639, %v1640
        %v1642 = vrot.slane %v1641, 1
        %v1643 = vmax.f32 %v1641, %v1642
        %v1644 = vsel %vm1418, %v1404, -inf
        %v1645 = vsel %vm1418, %v1405, -inf
        %v1646 = vmax.f32 %v1644, %v1645
        %v1647 = vrot.slane %v1646, 4
        %v1648 = vmax.f32 %v1646, %v1647
        %v1649 = vrot.slane %v1648, 2
        %v1650 = vmax.f32 %v1648, %v1649
        %v1651 = vrot.slane %v1650, 1
        %v1652 = vmax.f32 %v1650, %v1651
        %v1653 = vsel %vm1418, %v1406, -inf
        %v1654 = vsel %vm1418, %v1407, -inf
        %v1655 = vmax.f32 %v1653, %v1654
        %v1656 = vrot.slane %v1655, 4
        %v1657 = vmax.f32 %v1655, %v1656
        %v1658 = vrot.slane %v1657, 2
        %v1659 = vmax.f32 %v1657, %v1658
        %v1660 = vrot.slane %v1659, 1
        %v1661 = vmax.f32 %v1659, %v1660
        %v1662 = vsel %vm1418, %v1408, -inf
        %v1663 = vsel %vm1418, %v1409, -inf
        %v1664 = vmax.f32 %v1662, %v1663
        %v1665 = vrot.slane %v1664, 4
        %v1666 = vmax.f32 %v1664, %v1665
        %v1667 = vrot.slane %v1666, 2
        %v1668 = vmax.f32 %v1666, %v1667
        %v1669 = vrot.slane %v1668, 1
        %v1670 = vmax.f32 %v1668, %v1669
        %v1671 = vsel %vm1418, %v1410, -inf
        %v1672 = vsel %vm1418, %v1411, -inf
        %v1673 = vmax.f32 %v1671, %v1672
        %v1674 = vrot.slane %v1673, 4
        %v1675 = vmax.f32 %v1673, %v1674
        %v1676 = vrot.slane %v1675, 2
        %v1677 = vmax.f32 %v1675, %v1676
        %v1678 = vrot.slane %v1677, 1
        %v1679 = vmax.f32 %v1677, %v1678
        %v1680 = vsel %vm1418, %v1412, -inf
        %v1681 = vsel %vm1418, %v1413, -inf
        %v1682 = vmax.f32 %v1680, %v1681
        %v1683 = vrot.slane %v1682, 4
        %v1684 = vmax.f32 %v1682, %v1683
        %v1685 = vrot.slane %v1684, 2
        %v1686 = vmax.f32 %v1684, %v1685
        %v1687 = vrot.slane %v1686, 1
        %v1688 = vmax.f32 %v1686, %v1687
        %v1689 = vsel %vm1418, %v1414, -inf
        %v1690 = vsel %vm1418, %v1415, -inf
        %v1691 = vmax.f32 %v1689, %v1690
        %v1692 = vrot.slane %v1691, 4
        %v1693 = vmax.f32 %v1691, %v1692
        %v1694 = vrot.slane %v1693, 2
        %v1695 = vmax.f32 %v1693, %v1694
        %v1696 = vrot.slane %v1695, 1
        %v1697 = vmax.f32 %v1695, %v1696
        %v1698 = vsel %vm1418, %v1416, -inf
        %v1699 = vsel %vm1418, %v1417, -inf
        %v1700 = vmax.f32 %v1698, %v1699
        %v1701 = vrot.slane %v1700, 4
        %v1702 = vmax.f32 %v1700, %v1701
        %v1703 = vrot.slane %v1702, 2
        %v1704 = vmax.f32 %v1702, %v1703
        %v1705 = vrot.slane %v1704, 1
        %v1706 = vmax.f32 %v1704, %v1705
        %vm1739 = vcmask 1041409
        %v1740 = vsel %vm1739, %v1436, %v1427
        %vm1741 = vcmask 1042434
        %v1742 = vsel %vm1741, %v1445, %v1740
        %vm1743 = vcmask 1043459
        %v1744 = vsel %vm1743, %v1454, %v1742
        %vm1745 = vcmask 1044484
        %v1746 = vsel %vm1745, %v1463, %v1744
        %vm1747 = vcmask 1045509
        %v1748 = vsel %vm1747, %v1472, %v1746
        %vm1749 = vcmask 1046534
        %v1750 = vsel %vm1749, %v1481, %v1748
        %vm1751 = vcmask 1047559
        %v1752 = vsel %vm1751, %v1490, %v1750
        %v1753 = vsel %vm1739, %v1508, %v1499
        %v1754 = vsel %vm1741, %v1517, %v1753
        %v1755 = vsel %vm1743, %v1526, %v1754
        %v1756 = vsel %vm1745, %v1535, %v1755
        %v1757 = vsel %vm1747, %v1544, %v1756
        %v1758 = vsel %vm1749, %v1553, %v1757
        %v1759 = vsel %vm1751, %v1562, %v1758
        %v1760 = vsel %vm1739, %v1580, %v1571
        %v1761 = vsel %vm1741, %v1589, %v1760
        %v1762 = vsel %vm1743, %v1598, %v1761
        %v1763 = vsel %vm1745, %v1607, %v1762
        %v1764 = vsel %vm1747, %v1616, %v1763
        %v1765 = vsel %vm1749, %v1625, %v1764
        %v1766 = vsel %vm1751, %v1634, %v1765
        %v1767 = vsel %vm1739, %v1652, %v1643
        %v1768 = vsel %vm1741, %v1661, %v1767
        %v1769 = vsel %vm1743, %v1670, %v1768
        %v1770 = vsel %vm1745, %v1679, %v1769
        %v1771 = vsel %vm1747, %v1688, %v1770
        %v1772 = vsel %vm1749, %v1697, %v1771
        %v1773 = vsel %vm1751, %v1706, %v1772
        %1778 = vst.msk [vmem:[%s218] sm:$0xff] %vm1418, %v1752
        %1779 = vst.msk [vmem:[%s218 + $0x8] sm:$0xff] %vm1418, %v1759
        %1780 = vst.msk [vmem:[%s218 + $0x10] sm:$0xff] %vm1418, %v1766
        %1781 = vst.msk [vmem:[%s218 + $0x18] sm:$0xff] %vm1418, %v1773
        %s1782 = sand.u32 %s137, 1
        %s1783 = scalar_lea.sflag [#allocation3], %s1782
        %s1784 = sand.u32 %s137, 1
        %s1785 = smul.addr %s1784, 32
        %s1786 = scalar_lea.vmem [#allocation2], %s1785
        // Predicated region
        $region41: #{tpu_custom_call.1} parent=39 // pred_check
          %p1787 = pneg %p147
        $region42: #{tpu_custom_call.1} parent=39 // pred_check_branch
          %1789 = sbr.rel (%p1787) target = $region44
        $region43: #{tpu_custom_call.1} parent=39 // pred_region
          %s1790 = smul.u32 4, %s19
          %s1792 = ssub.s32 512, 512
          %1793 = vsyncadd %s1783, %s1792
          %s1794 = smul.addr %s1790, 128
          %s1795 = scalar_lea.hbm %s5, %s1794
          %s1796 = sshll.u32 %s1786, 4
          %s1797 = int_to_ptr.vmem [resolvable:$true] %s1796
          %1802 = dma.vmem_to_hbm [thread:$0]  %s1797, 512, %s1795, %s1783, 128, 128, 8
        $region44: #{tpu_custom_call.1} parent=39 // pred_fallthru
          _
      $region40: #{tpu_custom_call.1} parent=5 // pred_fallthru
        _
      %p1803 = scmp.le.s32.totalorder 2, %s14
      // Predicated region
      $region45: #{tpu_custom_call.1} parent=5 // pred_check
        %p1804 = pneg %p1803
      $region46: #{tpu_custom_call.1} parent=5 // pred_check_branch
        %1806 = sbr.rel (%p1804) target = $region48
      $region47: #{tpu_custom_call.1} parent=5 // pred_region
        %s1807 = ssub.s32 %s14, 2
        // Predicated region
        $region49: #{tpu_custom_call.1} parent=47 // pred_check
          %p1808 = pneg %p153
        $region50: #{tpu_custom_call.1} parent=47 // pred_check_branch
          %1810 = sbr.rel (%p1808) target = $region52
        $region51: #{tpu_custom_call.1} parent=47 // pred_region
          %s1811 = sand.u32 %s138, 1
          %s1812 = scalar_lea.sflag [#allocation3], %s1811
          %s1813 = sand.u32 %s138, 1
          %s1814 = smul.addr %s1813, 32
          %s1815 = scalar_lea.vmem [#allocation2], %s1814
          %1816 = dma.done %s1812, 512
        $region52: #{tpu_custom_call.1} parent=47 // pred_fallthru
          _
      $region48: #{tpu_custom_call.1} parent=5 // pred_fallthru
        _
    $region6: #{tpu_custom_call.1} parent=1 // loop_footer
      %s18 = sadd.s32 1, %s14
    $region7: #{tpu_custom_call.1} parent=1 // loop_footer_branch
      %13 = sbr.rel target = $region3
    $region8: #{tpu_custom_call.1} parent=1 // loop_exit
      _
    %1817 = vsyncpa [#allocation3], 1
    %s1818 = scalar_lea.sflag [#allocation3], 1
    %1819 = vsyncpa %s1818, 1

</llo_original>
